<compile_context>
chip_gen: v5e
topology: v5e:2x2
jax: 0.10.0
libtpu: 0.0.40
codegen_flags: <defaults>
</compile_context>

<pallas_src>
import functools

import jax
import jax.numpy as jnp
from jax.experimental import pallas as pl
from jax.experimental.pallas import tpu as pltpu

LANE = 128


def _rup(v, m=LANE):
    return ((v + m - 1) // m) * m


# ---------------------------------------------------------------- pallas glue
def _full_spec(shape):
    nd = len(shape)
    return pl.BlockSpec(shape, lambda i, _nd=nd: (0,) * _nd)


def _pcall(kernel, out_shape, *args):
    return pl.pallas_call(
        kernel,
        out_shape=jax.ShapeDtypeStruct(out_shape, jnp.float32),
        grid=(1,),
        in_specs=[_full_spec(a.shape) for a in args],
        out_specs=_full_spec(out_shape),
        compiler_params=pltpu.CompilerParams(dimension_semantics=("arbitrary",)),
    )(*args)


# -------------------------------------------------------------- fused kernel
def gin_fused_kernel(x_ref, adj_ref, pool_ref,
                     emb_w_ref, emb_b_ref,
                     w1_ref, b1_ref, w2_ref, b2_ref,
                     gamma_ref, beta_ref,
                     lin_w_ref, lin_b_ref,
                     o_ref, *, n_layer, eps=1e-5):
    """Whole GIN forward: emb -> n_layer residual GIN blocks -> pooled heads."""
    bf16 = jnp.bfloat16

    # embedding (dropout p=0 -> identity)
    h = (jnp.dot(x_ref[...].astype(bf16), emb_w_ref[...],
                 preferred_element_type=jnp.float32) + emb_b_ref[...])   # [N, HP] f32

    adj = adj_ref[...]      # [N, N]  bf16, adj[dst, src] = #edges src->dst
    pool = pool_ref[...]    # [G, N]  bf16, global_add_pool matrix
    out = jnp.zeros(o_ref.shape, jnp.float32)                            # [G, OP]

    for l in range(n_layer):                                             # static (3)
        # ---- GINConv: nn( x + sum_{neighbors} x )  (eps = 0) ----
        agg = h + jnp.dot(adj, h.astype(bf16),
                          preferred_element_type=jnp.float32)            # [N, HP]
        z = (jnp.dot(agg.astype(bf16), w1_ref[l],
                     preferred_element_type=jnp.float32) + b1_ref[l])
        z = jnp.maximum(z, 0.0)
        z = (jnp.dot(z.astype(bf16), w2_ref[l],
                     preferred_element_type=jnp.float32) + b2_ref[l])

        # ---- BatchNorm1d, training-mode batch statistics, affine ----
        mean = jnp.mean(z, axis=0, keepdims=True)
        var = jnp.mean((z - mean) ** 2, axis=0, keepdims=True)
        zn = (z - mean) * jax.lax.rsqrt(var + eps)
        zn = zn * gamma_ref[l] + beta_ref[l]

        # ---- ReLU + residual (dropout2 p=0 -> identity) ----
        h = jnp.maximum(zn, 0.0) + h

        # ---- per-layer readout: global_add_pool then Linear, accumulated ----
        pooled = jnp.dot(pool, h.astype(bf16),
                         preferred_element_type=jnp.float32)             # [G, HP]
        out = out + (jnp.dot(pooled.astype(bf16), lin_w_ref[l],
                             preferred_element_type=jnp.float32) + lin_b_ref[l])

    o_ref[...] = out


# --------------------------------------------------------------- params / fwd
def init_params(key, in_dim, hidden, out_dim, n_layer=3):
    """Weights are lane-padded to multiples of 128 and stacked per layer.
    Matmul weights stored bf16; biases / BN params stay f32."""
    ip, hp, op = _rup(in_dim), _rup(hidden), _rup(out_dim)
    keys = jax.random.split(key, 4 + 6 * n_layer)
    it = iter(keys)

    def nrm(shape, scale=0.1):
        return scale * jax.random.normal(next(it), shape, jnp.float32)

    def pad2(a, r, c):
        return jnp.pad(a, ((0, r - a.shape[0]), (0, c - a.shape[1])))

    params = {
        "dims": (in_dim, hidden, out_dim, ip, hp, op, n_layer),
        "emb_w": pad2(nrm((in_dim, hidden)), ip, hp).astype(jnp.bfloat16),
        "emb_b": pad2(nrm((1, hidden)), 1, hp),
    }
    w1, b1, w2, b2, gamma, beta, lw, lb = [], [], [], [], [], [], [], []
    for _ in range(n_layer):
        w1.append(pad2(nrm((hidden, hidden)), hp, hp))
        b1.append(pad2(nrm((1, hidden)), 1, hp))
        w2.append(pad2(nrm((hidden, hidden)), hp, hp))
        b2.append(pad2(nrm((1, hidden)), 1, hp))
        gamma.append(pad2(jnp.ones((1, hidden), jnp.float32), 1, hp))
        beta.append(pad2(jnp.zeros((1, hidden), jnp.float32), 1, hp))
        lw.append(pad2(nrm((hidden, out_dim)), hp, op))
        lb.append(pad2(nrm((1, out_dim)), 1, op))
    params["w1"] = jnp.stack(w1).astype(jnp.bfloat16)
    params["b1"] = jnp.stack(b1)
    params["w2"] = jnp.stack(w2).astype(jnp.bfloat16)
    params["b2"] = jnp.stack(b2)
    params["gamma"] = jnp.stack(gamma)
    params["beta"] = jnp.stack(beta)
    params["lin_w"] = jnp.stack(lw).astype(jnp.bfloat16)
    params["lin_b"] = jnp.stack(lb)
    return params


def gin_forward(params, x, edge_index, batch, n_graphs, cycle_index=None):
    del cycle_index  # present in the reference signature but unused
    in_dim, hidden, out_dim, ip, hp, op, n_layer = params["dims"]
    N = x.shape[0]

    # lane-pad node features
    x_p = jnp.pad(x, ((0, 0), (0, ip - x.shape[1])))

    # Dense message-passing matrix A[dst, src] = #edges src->dst (sum aggr,
    # duplicate edges accumulate — matches GINConv 'add' aggregation).
    src, dst = edge_index[0], edge_index[1]
    adj = jnp.zeros((N, N), jnp.float32).at[dst, src].add(1.0)

    # global_add_pool matrix: P[g, n] = 1 if batch[n] == g else 0
    pool = (batch[None, :] == jnp.arange(n_graphs)[:, None]).astype(jnp.float32)

    kern = functools.partial(gin_fused_kernel, n_layer=n_layer)
    out_p = _pcall(kern, (n_graphs, op),
                   x_p, adj.astype(jnp.bfloat16), pool.astype(jnp.bfloat16),
                   params["emb_w"], params["emb_b"],
                   params["w1"], params["b1"], params["w2"], params["b2"],
                   params["gamma"], params["beta"],
                   params["lin_w"], params["lin_b"])
    return out_p[:, :out_dim]


# --------------------------------------------------------------------- driver
if __name__ == "__main__":
    key = jax.random.PRNGKey(0)
    N, in_dim, hidden, out_dim = 16, 8, 32, 4
    n_graphs, n_layer = 2, 3

    k1, k2, k3 = jax.random.split(key, 3)
    x = jax.random.normal(k1, (N, in_dim), jnp.float32)

    # random (symmetrized) edge list
    src = jax.random.randint(k2, (24,), 0, N)
    dst = jax.random.randint(k3, (24,), 0, N)
    edge_index = jnp.stack([jnp.concatenate([src, dst]),
                            jnp.concatenate([dst, src])]).astype(jnp.int32)

    # first half of nodes -> graph 0, second half -> graph 1
    batch = jnp.concatenate([jnp.zeros(N // 2, jnp.int32),
                             jnp.ones(N // 2, jnp.int32)])

    params = init_params(jax.random.PRNGKey(12345), in_dim, hidden, out_dim,
                         n_layer=n_layer)

    out = gin_forward(params, x, edge_index, batch, n_graphs)
    jax.block_until_ready(out)
    assert out.shape == (n_graphs, out_dim)
    print("KERNEL_OK")
</pallas_src>

<mosaic_0001>
module attributes {stable_mosaic.version = 11 : i64} {
  func.func @gin_fused_kernel(%arg0: i32, %arg1: memref<16x128xf32, #tpu.memory_space<vmem>>, %arg2: memref<16x16xbf16, #tpu.memory_space<vmem>>, %arg3: memref<2x16xbf16, #tpu.memory_space<vmem>>, %arg4: memref<128x128xbf16, #tpu.memory_space<vmem>>, %arg5: memref<1x128xf32, #tpu.memory_space<vmem>>, %arg6: memref<3x128x128xbf16, #tpu.memory_space<vmem>>, %arg7: memref<3x1x128xf32, #tpu.memory_space<vmem>>, %arg8: memref<3x128x128xbf16, #tpu.memory_space<vmem>>, %arg9: memref<3x1x128xf32, #tpu.memory_space<vmem>>, %arg10: memref<3x1x128xf32, #tpu.memory_space<vmem>>, %arg11: memref<3x1x128xf32, #tpu.memory_space<vmem>>, %arg12: memref<3x128x128xbf16, #tpu.memory_space<vmem>>, %arg13: memref<3x1x128xf32, #tpu.memory_space<vmem>>, %arg14: memref<2x128xf32, #tpu.memory_space<vmem>>) attributes {dimension_semantics = [#tpu.dimension_semantics<arbitrary>], iteration_bounds = array<i64: 1>, scalar_prefetch = 0 : i64, scratch_operands = 0 : i64, tpu.core_type = #tpu.core_type<tc>, window_params = [{pipeline_mode = #tpu.pipeline_mode<synchronous>, transform_indices = @transform_0, window_bounds = array<i64: 16, 128>}, {pipeline_mode = #tpu.pipeline_mode<synchronous>, transform_indices = @transform_1, window_bounds = array<i64: 16, 16>}, {pipeline_mode = #tpu.pipeline_mode<synchronous>, transform_indices = @transform_2, window_bounds = array<i64: 2, 16>}, {pipeline_mode = #tpu.pipeline_mode<synchronous>, transform_indices = @transform_3, window_bounds = array<i64: 128, 128>}, {pipeline_mode = #tpu.pipeline_mode<synchronous>, transform_indices = @transform_4, window_bounds = array<i64: 1, 128>}, {pipeline_mode = #tpu.pipeline_mode<synchronous>, transform_indices = @transform_5, window_bounds = array<i64: 3, 128, 128>}, {pipeline_mode = #tpu.pipeline_mode<synchronous>, transform_indices = @transform_6, window_bounds = array<i64: 3, 1, 128>}, {pipeline_mode = #tpu.pipeline_mode<synchronous>, transform_indices = @transform_7, window_bounds = array<i64: 3, 128, 128>}, {pipeline_mode = #tpu.pipeline_mode<synchronous>, transform_indices = @transform_8, window_bounds = array<i64: 3, 1, 128>}, {pipeline_mode = #tpu.pipeline_mode<synchronous>, transform_indices = @transform_9, window_bounds = array<i64: 3, 1, 128>}, {pipeline_mode = #tpu.pipeline_mode<synchronous>, transform_indices = @transform_10, window_bounds = array<i64: 3, 1, 128>}, {pipeline_mode = #tpu.pipeline_mode<synchronous>, transform_indices = @transform_11, window_bounds = array<i64: 3, 128, 128>}, {pipeline_mode = #tpu.pipeline_mode<synchronous>, transform_indices = @transform_12, window_bounds = array<i64: 3, 1, 128>}, {pipeline_mode = #tpu.pipeline_mode<synchronous>, transform_indices = @transform_13, window_bounds = array<i64: 2, 128>}]} {
    %c0 = arith.constant 0 : index
    %c0_0 = arith.constant 0 : index
    %0 = vector.load %arg1[%c0, %c0_0] : memref<16x128xf32, #tpu.memory_space<vmem>>, vector<16x128xf32>
    %1 = arith.truncf %0 : vector<16x128xf32> to vector<16x128xbf16>
    %c0_1 = arith.constant 0 : index
    %c0_2 = arith.constant 0 : index
    %2 = vector.load %arg4[%c0_1, %c0_2] : memref<128x128xbf16, #tpu.memory_space<vmem>>, vector<128x128xbf16>
    %cst = arith.constant dense<0.000000e+00> : vector<16x128xf32>
    %3 = tpu.matmul %1, %2, %cst {dimension_numbers = #tpu.dot_dimension_numbers<[1], [0], [0], [1], [0, 0, 1, 1], [], []>} : vector<16x128xbf16>, vector<128x128xbf16>, vector<16x128xf32> -> vector<16x128xf32>
    %c0_3 = arith.constant 0 : index
    %c0_4 = arith.constant 0 : index
    %4 = vector.load %arg5[%c0_3, %c0_4] : memref<1x128xf32, #tpu.memory_space<vmem>>, vector<1x128xf32>
    %5 = vector.broadcast %4 : vector<1x128xf32> to vector<16x128xf32>
    %6 = arith.addf %3, %5 : vector<16x128xf32>
    %c0_5 = arith.constant 0 : index
    %c0_6 = arith.constant 0 : index
    %7 = vector.load %arg2[%c0_5, %c0_6] : memref<16x16xbf16, #tpu.memory_space<vmem>>, vector<16x16xbf16>
    %c0_7 = arith.constant 0 : index
    %c0_8 = arith.constant 0 : index
    %8 = vector.load %arg3[%c0_7, %c0_8] : memref<2x16xbf16, #tpu.memory_space<vmem>>, vector<2x16xbf16>
    %cst_9 = arith.constant 0.000000e+00 : f32
    %9 = vector.broadcast %cst_9 : f32 to vector<2x128xf32>
    %10 = arith.truncf %6 : vector<16x128xf32> to vector<16x128xbf16>
    %cst_10 = arith.constant dense<0.000000e+00> : vector<16x128xf32>
    %11 = tpu.matmul %7, %10, %cst_10 {dimension_numbers = #tpu.dot_dimension_numbers<[1], [0], [0], [1], [0, 0, 1, 1], [], []>} : vector<16x16xbf16>, vector<16x128xbf16>, vector<16x128xf32> -> vector<16x128xf32>
    %12 = arith.addf %6, %11 : vector<16x128xf32>
    %13 = arith.truncf %12 : vector<16x128xf32> to vector<16x128xbf16>
    %c0_11 = arith.constant 0 : index
    %c0_12 = arith.constant 0 : index
    %c0_13 = arith.constant 0 : index
    %14 = vector.load %arg6[%c0_11, %c0_12, %c0_13] : memref<3x128x128xbf16, #tpu.memory_space<vmem>>, vector<1x128x128xbf16>
    %15 = vector.shape_cast %14 : vector<1x128x128xbf16> to vector<128x128xbf16>
    %cst_14 = arith.constant dense<0.000000e+00> : vector<16x128xf32>
    %16 = tpu.matmul %13, %15, %cst_14 {dimension_numbers = #tpu.dot_dimension_numbers<[1], [0], [0], [1], [0, 0, 1, 1], [], []>} : vector<16x128xbf16>, vector<128x128xbf16>, vector<16x128xf32> -> vector<16x128xf32>
    %c0_15 = arith.constant 0 : index
    %c0_16 = arith.constant 0 : index
    %c0_17 = arith.constant 0 : index
    %17 = vector.load %arg7[%c0_15, %c0_16, %c0_17] : memref<3x1x128xf32, #tpu.memory_space<vmem>>, vector<1x1x128xf32>
    %18 = vector.shape_cast %17 : vector<1x1x128xf32> to vector<1x128xf32>
    %19 = vector.broadcast %18 : vector<1x128xf32> to vector<16x128xf32>
    %20 = arith.addf %16, %19 : vector<16x128xf32>
    %cst_18 = arith.constant 0.000000e+00 : f32
    %21 = vector.broadcast %cst_18 : f32 to vector<16x128xf32>
    %22 = arith.maximumf %20, %21 : vector<16x128xf32>
    %23 = arith.truncf %22 : vector<16x128xf32> to vector<16x128xbf16>
    %c0_19 = arith.constant 0 : index
    %c0_20 = arith.constant 0 : index
    %c0_21 = arith.constant 0 : index
    %24 = vector.load %arg8[%c0_19, %c0_20, %c0_21] : memref<3x128x128xbf16, #tpu.memory_space<vmem>>, vector<1x128x128xbf16>
    %25 = vector.shape_cast %24 : vector<1x128x128xbf16> to vector<128x128xbf16>
    %cst_22 = arith.constant dense<0.000000e+00> : vector<16x128xf32>
    %26 = tpu.matmul %23, %25, %cst_22 {dimension_numbers = #tpu.dot_dimension_numbers<[1], [0], [0], [1], [0, 0, 1, 1], [], []>} : vector<16x128xbf16>, vector<128x128xbf16>, vector<16x128xf32> -> vector<16x128xf32>
    %c0_23 = arith.constant 0 : index
    %c0_24 = arith.constant 0 : index
    %c0_25 = arith.constant 0 : index
    %27 = vector.load %arg9[%c0_23, %c0_24, %c0_25] : memref<3x1x128xf32, #tpu.memory_space<vmem>>, vector<1x1x128xf32>
    %28 = vector.shape_cast %27 : vector<1x1x128xf32> to vector<1x128xf32>
    %29 = vector.broadcast %28 : vector<1x128xf32> to vector<16x128xf32>
    %30 = arith.addf %26, %29 : vector<16x128xf32>
    %cst_26 = arith.constant dense<0.000000e+00> : vector<128xf32>
    %31 = vector.multi_reduction <add>, %30, %cst_26 [0] : vector<16x128xf32> to vector<128xf32>
    %32 = vector.shape_cast %31 : vector<128xf32> to vector<1x128xf32>
    %cst_27 = arith.constant 1.600000e+01 : f32
    %33 = vector.broadcast %cst_27 : f32 to vector<1x128xf32>
    %34 = arith.divf %32, %33 : vector<1x128xf32>
    %35 = vector.broadcast %34 : vector<1x128xf32> to vector<16x128xf32>
    %36 = arith.subf %30, %35 : vector<16x128xf32>
    %37 = arith.mulf %36, %36 : vector<16x128xf32>
    %cst_28 = arith.constant dense<0.000000e+00> : vector<128xf32>
    %38 = vector.multi_reduction <add>, %37, %cst_28 [0] : vector<16x128xf32> to vector<128xf32>
    %39 = vector.shape_cast %38 : vector<128xf32> to vector<1x128xf32>
    %cst_29 = arith.constant 1.600000e+01 : f32
    %40 = vector.broadcast %cst_29 : f32 to vector<1x128xf32>
    %41 = arith.divf %39, %40 : vector<1x128xf32>
    %42 = vector.broadcast %34 : vector<1x128xf32> to vector<16x128xf32>
    %43 = arith.subf %30, %42 : vector<16x128xf32>
    %cst_30 = arith.constant 9.99999974E-6 : f32
    %44 = vector.broadcast %cst_30 : f32 to vector<1x128xf32>
    %45 = arith.addf %41, %44 : vector<1x128xf32>
    %46 = math.rsqrt %45 : vector<1x128xf32>
    %47 = vector.broadcast %46 : vector<1x128xf32> to vector<16x128xf32>
    %48 = arith.mulf %43, %47 : vector<16x128xf32>
    %c0_31 = arith.constant 0 : index
    %c0_32 = arith.constant 0 : index
    %c0_33 = arith.constant 0 : index
    %49 = vector.load %arg10[%c0_31, %c0_32, %c0_33] : memref<3x1x128xf32, #tpu.memory_space<vmem>>, vector<1x1x128xf32>
    %50 = vector.shape_cast %49 : vector<1x1x128xf32> to vector<1x128xf32>
    %51 = vector.broadcast %50 : vector<1x128xf32> to vector<16x128xf32>
    %52 = arith.mulf %48, %51 : vector<16x128xf32>
    %c0_34 = arith.constant 0 : index
    %c0_35 = arith.constant 0 : index
    %c0_36 = arith.constant 0 : index
    %53 = vector.load %arg11[%c0_34, %c0_35, %c0_36] : memref<3x1x128xf32, #tpu.memory_space<vmem>>, vector<1x1x128xf32>
    %54 = vector.shape_cast %53 : vector<1x1x128xf32> to vector<1x128xf32>
    %55 = vector.broadcast %54 : vector<1x128xf32> to vector<16x128xf32>
    %56 = arith.addf %52, %55 : vector<16x128xf32>
    %cst_37 = arith.constant 0.000000e+00 : f32
    %57 = vector.broadcast %cst_37 : f32 to vector<16x128xf32>
    %58 = arith.maximumf %56, %57 : vector<16x128xf32>
    %59 = arith.addf %58, %6 : vector<16x128xf32>
    %60 = arith.truncf %59 : vector<16x128xf32> to vector<16x128xbf16>
    %cst_38 = arith.constant dense<0.000000e+00> : vector<2x128xf32>
    %61 = tpu.matmul %8, %60, %cst_38 {dimension_numbers = #tpu.dot_dimension_numbers<[1], [0], [0], [1], [0, 0, 1, 1], [], []>} : vector<2x16xbf16>, vector<16x128xbf16>, vector<2x128xf32> -> vector<2x128xf32>
    %62 = arith.truncf %61 : vector<2x128xf32> to vector<2x128xbf16>
    %c0_39 = arith.constant 0 : index
    %c0_40 = arith.constant 0 : index
    %c0_41 = arith.constant 0 : index
    %63 = vector.load %arg12[%c0_39, %c0_40, %c0_41] : memref<3x128x128xbf16, #tpu.memory_space<vmem>>, vector<1x128x128xbf16>
    %64 = vector.shape_cast %63 : vector<1x128x128xbf16> to vector<128x128xbf16>
    %cst_42 = arith.constant dense<0.000000e+00> : vector<2x128xf32>
    %65 = tpu.matmul %62, %64, %cst_42 {dimension_numbers = #tpu.dot_dimension_numbers<[1], [0], [0], [1], [0, 0, 1, 1], [], []>} : vector<2x128xbf16>, vector<128x128xbf16>, vector<2x128xf32> -> vector<2x128xf32>
    %c0_43 = arith.constant 0 : index
    %c0_44 = arith.constant 0 : index
    %c0_45 = arith.constant 0 : index
    %66 = vector.load %arg13[%c0_43, %c0_44, %c0_45] : memref<3x1x128xf32, #tpu.memory_space<vmem>>, vector<1x1x128xf32>
    %67 = vector.shape_cast %66 : vector<1x1x128xf32> to vector<1x128xf32>
    %68 = vector.broadcast %67 : vector<1x128xf32> to vector<2x128xf32>
    %69 = arith.addf %65, %68 : vector<2x128xf32>
    %70 = arith.addf %9, %69 : vector<2x128xf32>
    %71 = arith.truncf %59 : vector<16x128xf32> to vector<16x128xbf16>
    %cst_46 = arith.constant dense<0.000000e+00> : vector<16x128xf32>
    %72 = tpu.matmul %7, %71, %cst_46 {dimension_numbers = #tpu.dot_dimension_numbers<[1], [0], [0], [1], [0, 0, 1, 1], [], []>} : vector<16x16xbf16>, vector<16x128xbf16>, vector<16x128xf32> -> vector<16x128xf32>
    %73 = arith.addf %59, %72 : vector<16x128xf32>
    %74 = arith.truncf %73 : vector<16x128xf32> to vector<16x128xbf16>
    %c1 = arith.constant 1 : index
    %c0_47 = arith.constant 0 : index
    %c0_48 = arith.constant 0 : index
    %75 = vector.load %arg6[%c1, %c0_47, %c0_48] : memref<3x128x128xbf16, #tpu.memory_space<vmem>>, vector<1x128x128xbf16>
    %76 = vector.shape_cast %75 : vector<1x128x128xbf16> to vector<128x128xbf16>
    %cst_49 = arith.constant dense<0.000000e+00> : vector<16x128xf32>
    %77 = tpu.matmul %74, %76, %cst_49 {dimension_numbers = #tpu.dot_dimension_numbers<[1], [0], [0], [1], [0, 0, 1, 1], [], []>} : vector<16x128xbf16>, vector<128x128xbf16>, vector<16x128xf32> -> vector<16x128xf32>
    %c1_50 = arith.constant 1 : index
    %c0_51 = arith.constant 0 : index
    %c0_52 = arith.constant 0 : index
    %78 = vector.load %arg7[%c1_50, %c0_51, %c0_52] : memref<3x1x128xf32, #tpu.memory_space<vmem>>, vector<1x1x128xf32>
    %79 = vector.shape_cast %78 : vector<1x1x128xf32> to vector<1x128xf32>
    %80 = vector.broadcast %79 : vector<1x128xf32> to vector<16x128xf32>
    %81 = arith.addf %77, %80 : vector<16x128xf32>
    %cst_53 = arith.constant 0.000000e+00 : f32
    %82 = vector.broadcast %cst_53 : f32 to vector<16x128xf32>
    %83 = arith.maximumf %81, %82 : vector<16x128xf32>
    %84 = arith.truncf %83 : vector<16x128xf32> to vector<16x128xbf16>
    %c1_54 = arith.constant 1 : index
    %c0_55 = arith.constant 0 : index
    %c0_56 = arith.constant 0 : index
    %85 = vector.load %arg8[%c1_54, %c0_55, %c0_56] : memref<3x128x128xbf16, #tpu.memory_space<vmem>>, vector<1x128x128xbf16>
    %86 = vector.shape_cast %85 : vector<1x128x128xbf16> to vector<128x128xbf16>
    %cst_57 = arith.constant dense<0.000000e+00> : vector<16x128xf32>
    %87 = tpu.matmul %84, %86, %cst_57 {dimension_numbers = #tpu.dot_dimension_numbers<[1], [0], [0], [1], [0, 0, 1, 1], [], []>} : vector<16x128xbf16>, vector<128x128xbf16>, vector<16x128xf32> -> vector<16x128xf32>
    %c1_58 = arith.constant 1 : index
    %c0_59 = arith.constant 0 : index
    %c0_60 = arith.constant 0 : index
    %88 = vector.load %arg9[%c1_58, %c0_59, %c0_60] : memref<3x1x128xf32, #tpu.memory_space<vmem>>, vector<1x1x128xf32>
    %89 = vector.shape_cast %88 : vector<1x1x128xf32> to vector<1x128xf32>
    %90 = vector.broadcast %89 : vector<1x128xf32> to vector<16x128xf32>
    %91 = arith.addf %87, %90 : vector<16x128xf32>
    %cst_61 = arith.constant dense<0.000000e+00> : vector<128xf32>
    %92 = vector.multi_reduction <add>, %91, %cst_61 [0] : vector<16x128xf32> to vector<128xf32>
    %93 = vector.shape_cast %92 : vector<128xf32> to vector<1x128xf32>
    %cst_62 = arith.constant 1.600000e+01 : f32
    %94 = vector.broadcast %cst_62 : f32 to vector<1x128xf32>
    %95 = arith.divf %93, %94 : vector<1x128xf32>
    %96 = vector.broadcast %95 : vector<1x128xf32> to vector<16x128xf32>
    %97 = arith.subf %91, %96 : vector<16x128xf32>
    %98 = arith.mulf %97, %97 : vector<16x128xf32>
    %cst_63 = arith.constant dense<0.000000e+00> : vector<128xf32>
    %99 = vector.multi_reduction <add>, %98, %cst_63 [0] : vector<16x128xf32> to vector<128xf32>
    %100 = vector.shape_cast %99 : vector<128xf32> to vector<1x128xf32>
    %cst_64 = arith.constant 1.600000e+01 : f32
    %101 = vector.broadcast %cst_64 : f32 to vector<1x128xf32>
    %102 = arith.divf %100, %101 : vector<1x128xf32>
    %103 = vector.broadcast %95 : vector<1x128xf32> to vector<16x128xf32>
    %104 = arith.subf %91, %103 : vector<16x128xf32>
    %cst_65 = arith.constant 9.99999974E-6 : f32
    %105 = vector.broadcast %cst_65 : f32 to vector<1x128xf32>
    %106 = arith.addf %102, %105 : vector<1x128xf32>
    %107 = math.rsqrt %106 : vector<1x128xf32>
    %108 = vector.broadcast %107 : vector<1x128xf32> to vector<16x128xf32>
    %109 = arith.mulf %104, %108 : vector<16x128xf32>
    %c1_66 = arith.constant 1 : index
    %c0_67 = arith.constant 0 : index
    %c0_68 = arith.constant 0 : index
    %110 = vector.load %arg10[%c1_66, %c0_67, %c0_68] : memref<3x1x128xf32, #tpu.memory_space<vmem>>, vector<1x1x128xf32>
    %111 = vector.shape_cast %110 : vector<1x1x128xf32> to vector<1x128xf32>
    %112 = vector.broadcast %111 : vector<1x128xf32> to vector<16x128xf32>
    %113 = arith.mulf %109, %112 : vector<16x128xf32>
    %c1_69 = arith.constant 1 : index
    %c0_70 = arith.constant 0 : index
    %c0_71 = arith.constant 0 : index
    %114 = vector.load %arg11[%c1_69, %c0_70, %c0_71] : memref<3x1x128xf32, #tpu.memory_space<vmem>>, vector<1x1x128xf32>
    %115 = vector.shape_cast %114 : vector<1x1x128xf32> to vector<1x128xf32>
    %116 = vector.broadcast %115 : vector<1x128xf32> to vector<16x128xf32>
    %117 = arith.addf %113, %116 : vector<16x128xf32>
    %cst_72 = arith.constant 0.000000e+00 : f32
    %118 = vector.broadcast %cst_72 : f32 to vector<16x128xf32>
    %119 = arith.maximumf %117, %118 : vector<16x128xf32>
    %120 = arith.addf %119, %59 : vector<16x128xf32>
    %121 = arith.truncf %120 : vector<16x128xf32> to vector<16x128xbf16>
    %cst_73 = arith.constant dense<0.000000e+00> : vector<2x128xf32>
    %122 = tpu.matmul %8, %121, %cst_73 {dimension_numbers = #tpu.dot_dimension_numbers<[1], [0], [0], [1], [0, 0, 1, 1], [], []>} : vector<2x16xbf16>, vector<16x128xbf16>, vector<2x128xf32> -> vector<2x128xf32>
    %123 = arith.truncf %122 : vector<2x128xf32> to vector<2x128xbf16>
    %c1_74 = arith.constant 1 : index
    %c0_75 = arith.constant 0 : index
    %c0_76 = arith.constant 0 : index
    %124 = vector.load %arg12[%c1_74, %c0_75, %c0_76] : memref<3x128x128xbf16, #tpu.memory_space<vmem>>, vector<1x128x128xbf16>
    %125 = vector.shape_cast %124 : vector<1x128x128xbf16> to vector<128x128xbf16>
    %cst_77 = arith.constant dense<0.000000e+00> : vector<2x128xf32>
    %126 = tpu.matmul %123, %125, %cst_77 {dimension_numbers = #tpu.dot_dimension_numbers<[1], [0], [0], [1], [0, 0, 1, 1], [], []>} : vector<2x128xbf16>, vector<128x128xbf16>, vector<2x128xf32> -> vector<2x128xf32>
    %c1_78 = arith.constant 1 : index
    %c0_79 = arith.constant 0 : index
    %c0_80 = arith.constant 0 : index
    %127 = vector.load %arg13[%c1_78, %c0_79, %c0_80] : memref<3x1x128xf32, #tpu.memory_space<vmem>>, vector<1x1x128xf32>
    %128 = vector.shape_cast %127 : vector<1x1x128xf32> to vector<1x128xf32>
    %129 = vector.broadcast %128 : vector<1x128xf32> to vector<2x128xf32>
    %130 = arith.addf %126, %129 : vector<2x128xf32>
    %131 = arith.addf %70, %130 : vector<2x128xf32>
    %132 = arith.truncf %120 : vector<16x128xf32> to vector<16x128xbf16>
    %cst_81 = arith.constant dense<0.000000e+00> : vector<16x128xf32>
    %133 = tpu.matmul %7, %132, %cst_81 {dimension_numbers = #tpu.dot_dimension_numbers<[1], [0], [0], [1], [0, 0, 1, 1], [], []>} : vector<16x16xbf16>, vector<16x128xbf16>, vector<16x128xf32> -> vector<16x128xf32>
    %134 = arith.addf %120, %133 : vector<16x128xf32>
    %135 = arith.truncf %134 : vector<16x128xf32> to vector<16x128xbf16>
    %c2 = arith.constant 2 : index
    %c0_82 = arith.constant 0 : index
    %c0_83 = arith.constant 0 : index
    %136 = vector.load %arg6[%c2, %c0_82, %c0_83] : memref<3x128x128xbf16, #tpu.memory_space<vmem>>, vector<1x128x128xbf16>
    %137 = vector.shape_cast %136 : vector<1x128x128xbf16> to vector<128x128xbf16>
    %cst_84 = arith.constant dense<0.000000e+00> : vector<16x128xf32>
    %138 = tpu.matmul %135, %137, %cst_84 {dimension_numbers = #tpu.dot_dimension_numbers<[1], [0], [0], [1], [0, 0, 1, 1], [], []>} : vector<16x128xbf16>, vector<128x128xbf16>, vector<16x128xf32> -> vector<16x128xf32>
    %c2_85 = arith.constant 2 : index
    %c0_86 = arith.constant 0 : index
    %c0_87 = arith.constant 0 : index
    %139 = vector.load %arg7[%c2_85, %c0_86, %c0_87] : memref<3x1x128xf32, #tpu.memory_space<vmem>>, vector<1x1x128xf32>
    %140 = vector.shape_cast %139 : vector<1x1x128xf32> to vector<1x128xf32>
    %141 = vector.broadcast %140 : vector<1x128xf32> to vector<16x128xf32>
    %142 = arith.addf %138, %141 : vector<16x128xf32>
    %cst_88 = arith.constant 0.000000e+00 : f32
    %143 = vector.broadcast %cst_88 : f32 to vector<16x128xf32>
    %144 = arith.maximumf %142, %143 : vector<16x128xf32>
    %145 = arith.truncf %144 : vector<16x128xf32> to vector<16x128xbf16>
    %c2_89 = arith.constant 2 : index
    %c0_90 = arith.constant 0 : index
    %c0_91 = arith.constant 0 : index
    %146 = vector.load %arg8[%c2_89, %c0_90, %c0_91] : memref<3x128x128xbf16, #tpu.memory_space<vmem>>, vector<1x128x128xbf16>
    %147 = vector.shape_cast %146 : vector<1x128x128xbf16> to vector<128x128xbf16>
    %cst_92 = arith.constant dense<0.000000e+00> : vector<16x128xf32>
    %148 = tpu.matmul %145, %147, %cst_92 {dimension_numbers = #tpu.dot_dimension_numbers<[1], [0], [0], [1], [0, 0, 1, 1], [], []>} : vector<16x128xbf16>, vector<128x128xbf16>, vector<16x128xf32> -> vector<16x128xf32>
    %c2_93 = arith.constant 2 : index
    %c0_94 = arith.constant 0 : index
    %c0_95 = arith.constant 0 : index
    %149 = vector.load %arg9[%c2_93, %c0_94, %c0_95] : memref<3x1x128xf32, #tpu.memory_space<vmem>>, vector<1x1x128xf32>
    %150 = vector.shape_cast %149 : vector<1x1x128xf32> to vector<1x128xf32>
    %151 = vector.broadcast %150 : vector<1x128xf32> to vector<16x128xf32>
    %152 = arith.addf %148, %151 : vector<16x128xf32>
    %cst_96 = arith.constant dense<0.000000e+00> : vector<128xf32>
    %153 = vector.multi_reduction <add>, %152, %cst_96 [0] : vector<16x128xf32> to vector<128xf32>
    %154 = vector.shape_cast %153 : vector<128xf32> to vector<1x128xf32>
    %cst_97 = arith.constant 1.600000e+01 : f32
    %155 = vector.broadcast %cst_97 : f32 to vector<1x128xf32>
    %156 = arith.divf %154, %155 : vector<1x128xf32>
    %157 = vector.broadcast %156 : vector<1x128xf32> to vector<16x128xf32>
    %158 = arith.subf %152, %157 : vector<16x128xf32>
    %159 = arith.mulf %158, %158 : vector<16x128xf32>
    %cst_98 = arith.constant dense<0.000000e+00> : vector<128xf32>
    %160 = vector.multi_reduction <add>, %159, %cst_98 [0] : vector<16x128xf32> to vector<128xf32>
    %161 = vector.shape_cast %160 : vector<128xf32> to vector<1x128xf32>
    %cst_99 = arith.constant 1.600000e+01 : f32
    %162 = vector.broadcast %cst_99 : f32 to vector<1x128xf32>
    %163 = arith.divf %161, %162 : vector<1x128xf32>
    %164 = vector.broadcast %156 : vector<1x128xf32> to vector<16x128xf32>
    %165 = arith.subf %152, %164 : vector<16x128xf32>
    %cst_100 = arith.constant 9.99999974E-6 : f32
    %166 = vector.broadcast %cst_100 : f32 to vector<1x128xf32>
    %167 = arith.addf %163, %166 : vector<1x128xf32>
    %168 = math.rsqrt %167 : vector<1x128xf32>
    %169 = vector.broadcast %168 : vector<1x128xf32> to vector<16x128xf32>
    %170 = arith.mulf %165, %169 : vector<16x128xf32>
    %c2_101 = arith.constant 2 : index
    %c0_102 = arith.constant 0 : index
    %c0_103 = arith.constant 0 : index
    %171 = vector.load %arg10[%c2_101, %c0_102, %c0_103] : memref<3x1x128xf32, #tpu.memory_space<vmem>>, vector<1x1x128xf32>
    %172 = vector.shape_cast %171 : vector<1x1x128xf32> to vector<1x128xf32>
    %173 = vector.broadcast %172 : vector<1x128xf32> to vector<16x128xf32>
    %174 = arith.mulf %170, %173 : vector<16x128xf32>
    %c2_104 = arith.constant 2 : index
    %c0_105 = arith.constant 0 : index
    %c0_106 = arith.constant 0 : index
    %175 = vector.load %arg11[%c2_104, %c0_105, %c0_106] : memref<3x1x128xf32, #tpu.memory_space<vmem>>, vector<1x1x128xf32>
    %176 = vector.shape_cast %175 : vector<1x1x128xf32> to vector<1x128xf32>
    %177 = vector.broadcast %176 : vector<1x128xf32> to vector<16x128xf32>
    %178 = arith.addf %174, %177 : vector<16x128xf32>
    %cst_107 = arith.constant 0.000000e+00 : f32
    %179 = vector.broadcast %cst_107 : f32 to vector<16x128xf32>
    %180 = arith.maximumf %178, %179 : vector<16x128xf32>
    %181 = arith.addf %180, %120 : vector<16x128xf32>
    %182 = arith.truncf %181 : vector<16x128xf32> to vector<16x128xbf16>
    %cst_108 = arith.constant dense<0.000000e+00> : vector<2x128xf32>
    %183 = tpu.matmul %8, %182, %cst_108 {dimension_numbers = #tpu.dot_dimension_numbers<[1], [0], [0], [1], [0, 0, 1, 1], [], []>} : vector<2x16xbf16>, vector<16x128xbf16>, vector<2x128xf32> -> vector<2x128xf32>
    %184 = arith.truncf %183 : vector<2x128xf32> to vector<2x128xbf16>
    %c2_109 = arith.constant 2 : index
    %c0_110 = arith.constant 0 : index
    %c0_111 = arith.constant 0 : index
    %185 = vector.load %arg12[%c2_109, %c0_110, %c0_111] : memref<3x128x128xbf16, #tpu.memory_space<vmem>>, vector<1x128x128xbf16>
    %186 = vector.shape_cast %185 : vector<1x128x128xbf16> to vector<128x128xbf16>
    %cst_112 = arith.constant dense<0.000000e+00> : vector<2x128xf32>
    %187 = tpu.matmul %184, %186, %cst_112 {dimension_numbers = #tpu.dot_dimension_numbers<[1], [0], [0], [1], [0, 0, 1, 1], [], []>} : vector<2x128xbf16>, vector<128x128xbf16>, vector<2x128xf32> -> vector<2x128xf32>
    %c2_113 = arith.constant 2 : index
    %c0_114 = arith.constant 0 : index
    %c0_115 = arith.constant 0 : index
    %188 = vector.load %arg13[%c2_113, %c0_114, %c0_115] : memref<3x1x128xf32, #tpu.memory_space<vmem>>, vector<1x1x128xf32>
    %189 = vector.shape_cast %188 : vector<1x1x128xf32> to vector<1x128xf32>
    %190 = vector.broadcast %189 : vector<1x128xf32> to vector<2x128xf32>
    %191 = arith.addf %187, %190 : vector<2x128xf32>
    %192 = arith.addf %131, %191 : vector<2x128xf32>
    %c0_116 = arith.constant 0 : index
    %c0_117 = arith.constant 0 : index
    %193 = vector.load %arg14[%c0_116, %c0_117] : memref<2x128xf32, #tpu.memory_space<vmem>>, vector<2x128xf32>
    tpu.vector_store %arg14[%c0_116, %c0_117], %192 {strides = array<i32>} : memref<2x128xf32, #tpu.memory_space<vmem>>, vector<2x128xf32>,
    return
  }
  func.func @transform_0(%arg0: i32) -> (i32, i32) {
    %c0_i32 = arith.constant 0 : i32
    %c0_i32_0 = arith.constant 0 : i32
    %c0_i32_1 = arith.constant 0 : i32
    return %c0_i32, %c0_i32_0 : i32, i32
  }
  func.func @transform_1(%arg0: i32) -> (i32, i32) {
    %c0_i32 = arith.constant 0 : i32
    %c0_i32_0 = arith.constant 0 : i32
    %c0_i32_1 = arith.constant 0 : i32
    return %c0_i32, %c0_i32_0 : i32, i32
  }
  func.func @transform_2(%arg0: i32) -> (i32, i32) {
    %c0_i32 = arith.constant 0 : i32
    %c0_i32_0 = arith.constant 0 : i32
    %c0_i32_1 = arith.constant 0 : i32
    return %c0_i32, %c0_i32_0 : i32, i32
  }
  func.func @transform_3(%arg0: i32) -> (i32, i32) {
    %c0_i32 = arith.constant 0 : i32
    %c0_i32_0 = arith.constant 0 : i32
    %c0_i32_1 = arith.constant 0 : i32
    return %c0_i32, %c0_i32_0 : i32, i32
  }
  func.func @transform_4(%arg0: i32) -> (i32, i32) {
    %c0_i32 = arith.constant 0 : i32
    %c0_i32_0 = arith.constant 0 : i32
    %c0_i32_1 = arith.constant 0 : i32
    return %c0_i32, %c0_i32_0 : i32, i32
  }
  func.func @transform_5(%arg0: i32) -> (i32, i32, i32) {
    %c0_i32 = arith.constant 0 : i32
    %c0_i32_0 = arith.constant 0 : i32
    %c0_i32_1 = arith.constant 0 : i32
    %c0_i32_2 = arith.constant 0 : i32
    return %c0_i32, %c0_i32_0, %c0_i32_1 : i32, i32, i32
  }
  func.func @transform_6(%arg0: i32) -> (i32, i32, i32) {
    %c0_i32 = arith.constant 0 : i32
    %c0_i32_0 = arith.constant 0 : i32
    %c0_i32_1 = arith.constant 0 : i32
    %c0_i32_2 = arith.constant 0 : i32
    return %c0_i32, %c0_i32_0, %c0_i32_1 : i32, i32, i32
  }
  func.func @transform_7(%arg0: i32) -> (i32, i32, i32) {
    %c0_i32 = arith.constant 0 : i32
    %c0_i32_0 = arith.constant 0 : i32
    %c0_i32_1 = arith.constant 0 : i32
    %c0_i32_2 = arith.constant 0 : i32
    return %c0_i32, %c0_i32_0, %c0_i32_1 : i32, i32, i32
  }
  func.func @transform_8(%arg0: i32) -> (i32, i32, i32) {
    %c0_i32 = arith.constant 0 : i32
    %c0_i32_0 = arith.constant 0 : i32
    %c0_i32_1 = arith.constant 0 : i32
    %c0_i32_2 = arith.constant 0 : i32
    return %c0_i32, %c0_i32_0, %c0_i32_1 : i32, i32, i32
  }
  func.func @transform_9(%arg0: i32) -> (i32, i32, i32) {
    %c0_i32 = arith.constant 0 : i32
    %c0_i32_0 = arith.constant 0 : i32
    %c0_i32_1 = arith.constant 0 : i32
    %c0_i32_2 = arith.constant 0 : i32
    return %c0_i32, %c0_i32_0, %c0_i32_1 : i32, i32, i32
  }
  func.func @transform_10(%arg0: i32) -> (i32, i32, i32) {
    %c0_i32 = arith.constant 0 : i32
    %c0_i32_0 = arith.constant 0 : i32
    %c0_i32_1 = arith.constant 0 : i32
    %c0_i32_2 = arith.constant 0 : i32
    return %c0_i32, %c0_i32_0, %c0_i32_1 : i32, i32, i32
  }
  func.func @transform_11(%arg0: i32) -> (i32, i32, i32) {
    %c0_i32 = arith.constant 0 : i32
    %c0_i32_0 = arith.constant 0 : i32
    %c0_i32_1 = arith.constant 0 : i32
    %c0_i32_2 = arith.constant 0 : i32
    return %c0_i32, %c0_i32_0, %c0_i32_1 : i32, i32, i32
  }
  func.func @transform_12(%arg0: i32) -> (i32, i32, i32) {
    %c0_i32 = arith.constant 0 : i32
    %c0_i32_0 = arith.constant 0 : i32
    %c0_i32_1 = arith.constant 0 : i32
    %c0_i32_2 = arith.constant 0 : i32
    return %c0_i32, %c0_i32_0, %c0_i32_1 : i32, i32, i32
  }
  func.func @transform_13(%arg0: i32) -> (i32, i32) {
    %c0_i32 = arith.constant 0 : i32
    %c0_i32_0 = arith.constant 0 : i32
    %c0_i32_1 = arith.constant 0 : i32
    return %c0_i32, %c0_i32_0 : i32, i32
  }
}

</mosaic_0001>

<llo_original>
// kernel: tpu_custom_call.1
$region0: #{tpu_custom_call.1}
  #allocation0 [shape = 'u32[]', space=smem, size = 0x4, offset = 0x4, fixed_abs, tag = 'smem constant byte address 0x4 - core index']
  #allocation1 [shape = 'u32[72,128]{1,0:T(1,128)}', space=vmem, size = 0x9000, scoped, tag = 'internal scratch']
  %s0 = inlined_call_operand.hbm [shape: f32[16,128], index: 0, kind: input, shape index: {}]
  %s1 = inlined_call_operand.hbm [shape: bf16[16,16], index: 1, kind: input, shape index: {}]
  %s2 = inlined_call_operand.hbm [shape: bf16[2,16], index: 2, kind: input, shape index: {}]
  %s3 = inlined_call_operand.hbm [shape: bf16[128,128], index: 3, kind: input, shape index: {}]
  %s4 = inlined_call_operand.hbm [shape: f32[1,128], index: 4, kind: input, shape index: {}]
  %s5 = inlined_call_operand.hbm [shape: bf16[3,128,128], index: 5, kind: input, shape index: {}]
  %s6 = inlined_call_operand.vmem [shape: f32[3,1,128], index: 6, kind: input, shape index: {}]
  %s7 = inlined_call_operand.hbm [shape: bf16[3,128,128], index: 7, kind: input, shape index: {}]
  %s8 = inlined_call_operand.vmem [shape: f32[3,1,128], index: 8, kind: input, shape index: {}]
  %s9 = inlined_call_operand.hbm [shape: f32[3,1,128], index: 9, kind: input, shape index: {}]
  %s10 = inlined_call_operand.vmem [shape: f32[3,1,128], index: 10, kind: input, shape index: {}]
  %s11 = inlined_call_operand.hbm [shape: bf16[3,128,128], index: 11, kind: input, shape index: {}]
  %s12 = inlined_call_operand.hbm [shape: f32[3,1,128], index: 12, kind: input, shape index: {}]
  %s13 = inlined_call_operand.hbm [shape: f32[2,128], index: 13, kind: output, shape index: {}]
  %s14 = sld [smem:[#allocation0]]
  $region102: #{tpu_custom_call.1} parent=0
    _
  %s16 = ssub.s32 1, %s14
  %s17 = scalar_select 0, %s16, %s14
  $region1: #{tpu_custom_call.1} parent=0
    #allocation2 [shape = 'u8[8192]{0}', space=vmem, size = 0x2000, scoped, tag = 'input window, operand 0, single buffered']
    #allocation3 [shape = 's32[1]{0}', space=sflag, size = 0x4, scoped, tag = 'scoped memory for tpu_custom_call.1']
    #allocation4 [shape = 's32[1]{0}', space=sflag, size = 0x4, scoped, tag = 'scoped memory for tpu_custom_call.1']
    #allocation5 [shape = 'u8[4096]{0}', space=vmem, size = 0x1000, scoped, tag = 'input window, operand 1, single buffered']
    #allocation6 [shape = 's32[1]{0}', space=sflag, size = 0x4, scoped, tag = 'scoped memory for tpu_custom_call.1']
    #allocation7 [shape = 'u8[512]{0}', space=vmem, size = 0x400, scoped, tag = 'input window, operand 2, single buffered']
    #allocation8 [shape = 'u8[32768]{0}', space=vmem, size = 0x8000, scoped, tag = 'input window, operand 3, single buffered']
    #allocation9 [shape = 's32[1]{0}', space=sflag, size = 0x4, scoped, tag = 'scoped memory for tpu_custom_call.1']
    #allocation10 [shape = 'u8[512]{0}', space=vmem, size = 0x400, scoped, tag = 'input window, operand 4, single buffered']
    #allocation11 [shape = 'u8[98304]{0}', space=vmem, size = 0x18000, scoped, tag = 'input window, operand 5, single buffered']
    #allocation12 [shape = 's32[1]{0}', space=sflag, size = 0x4, scoped, tag = 'scoped memory for tpu_custom_call.1']
    #allocation13 [shape = 'u8[98304]{0}', space=vmem, size = 0x18000, scoped, tag = 'input window, operand 7, single buffered']
    #allocation14 [shape = 'u8[1536]{0}', space=vmem, size = 0x800, scoped, tag = 'input window, operand 9, single buffered']
    #allocation15 [shape = 's32[1]{0}', space=sflag, size = 0x4, scoped, tag = 'scoped memory for tpu_custom_call.1']
    #allocation16 [shape = 'u8[98304]{0}', space=vmem, size = 0x18000, scoped, tag = 'input window, operand 11, single buffered']
    #allocation17 [shape = 'u8[1536]{0}', space=vmem, size = 0x800, scoped, tag = 'input window, operand 12, single buffered']
    #allocation18 [shape = 's32[1]{0}', space=sflag, size = 0x4, scoped, tag = 'scoped memory for tpu_custom_call.1']
    #allocation19 [shape = 'u8[1024]{0}', space=vmem, size = 0x400, scoped, tag = 'output window, operand 0, single buffered']
    %18 = vsyncpa [#allocation3], 0
    %19 = vsyncpa [#allocation6], 0
    %20 = vsyncpa [#allocation9], 0
    %21 = vsyncpa [#allocation12], 0
    %22 = vsyncpa [#allocation15], 0
    %23 = vsyncpa [#allocation18], 0
    %24 = vsyncpa [#allocation4], 0
    // Predicated region
    $region2: #{tpu_custom_call.1} parent=1 // pred_check
      _
    $region3: #{tpu_custom_call.1} parent=1 // pred_check_branch
      %26 = sbr.rel (0) target = $region5
    $region4: #{tpu_custom_call.1} parent=1 // pred_region
      %28 = vsyncadd [#allocation3], 0
      %s29 = sshll.u32 %s0, 4
      %s30 = int_to_ptr.hbm [resolvable:$true] %s29
      %s31 = sshll.u32 [#allocation2], 4
      %s32 = int_to_ptr.vmem [resolvable:$true] %s31
      %37 = dma.hbm_to_vmem [thread:$0]  %s30, 256, %s32, [#allocation3], 128, 128, 8
    $region5: #{tpu_custom_call.1} parent=1 // pred_fallthru
      _
    // Predicated region
    $region6: #{tpu_custom_call.1} parent=1 // pred_check
      _
    $region7: #{tpu_custom_call.1} parent=1 // pred_check_branch
      %39 = sbr.rel (0) target = $region9
    $region8: #{tpu_custom_call.1} parent=1 // pred_region
      %41 = vsyncadd [#allocation6], 0
      %s42 = sshll.u32 %s1, 4
      %s43 = int_to_ptr.hbm [resolvable:$true] %s42
      %s44 = sshll.u32 [#allocation5], 4
      %s45 = int_to_ptr.vmem [resolvable:$true] %s44
      %50 = dma.hbm_to_vmem [thread:$0]  %s43, 128, %s45, [#allocation6], 64, 64, 4
    $region9: #{tpu_custom_call.1} parent=1 // pred_fallthru
      _
    // Predicated region
    $region10: #{tpu_custom_call.1} parent=1 // pred_check
      _
    $region11: #{tpu_custom_call.1} parent=1 // pred_check_branch
      %52 = sbr.rel (0) target = $region13
    $region12: #{tpu_custom_call.1} parent=1 // pred_region
      %54 = vsyncadd [#allocation6], 0
      %s56 = sshll.u32 %s2, 4
      %s57 = int_to_ptr.hbm [resolvable:$true] %s56
      %s58 = sshll.u32 [#allocation7], 4
      %s59 = int_to_ptr.vmem [resolvable:$true] %s58
      %61 = dma.hbm_to_vmem [thread:$0]  %s57, 16, %s59, [#allocation6]
    $region13: #{tpu_custom_call.1} parent=1 // pred_fallthru
      _
    // Predicated region
    $region14: #{tpu_custom_call.1} parent=1 // pred_check
      _
    $region15: #{tpu_custom_call.1} parent=1 // pred_check_branch
      %63 = sbr.rel (0) target = $region17
    $region16: #{tpu_custom_call.1} parent=1 // pred_region
      %65 = vsyncadd [#allocation9], 0
      %s66 = sshll.u32 %s3, 4
      %s67 = int_to_ptr.hbm [resolvable:$true] %s66
      %s68 = sshll.u32 [#allocation8], 4
      %s69 = int_to_ptr.vmem [resolvable:$true] %s68
      %74 = dma.hbm_to_vmem [thread:$0]  %s67, 1024, %s69, [#allocation9], 64, 64, 4
    $region17: #{tpu_custom_call.1} parent=1 // pred_fallthru
      _
    // Predicated region
    $region18: #{tpu_custom_call.1} parent=1 // pred_check
      _
    $region19: #{tpu_custom_call.1} parent=1 // pred_check_branch
      %76 = sbr.rel (0) target = $region21
    $region20: #{tpu_custom_call.1} parent=1 // pred_region
      %78 = vsyncadd [#allocation9], 0
      %s80 = sshll.u32 %s4, 4
      %s81 = int_to_ptr.hbm [resolvable:$true] %s80
      %s82 = sshll.u32 [#allocation10], 4
      %s83 = int_to_ptr.vmem [resolvable:$true] %s82
      %85 = dma.hbm_to_vmem [thread:$0]  %s81, 16, %s83, [#allocation9]
    $region21: #{tpu_custom_call.1} parent=1 // pred_fallthru
      _
    // Predicated region
    $region22: #{tpu_custom_call.1} parent=1 // pred_check
      _
    $region23: #{tpu_custom_call.1} parent=1 // pred_check_branch
      %87 = sbr.rel (0) target = $region25
    $region24: #{tpu_custom_call.1} parent=1 // pred_region
      %89 = vsyncadd [#allocation12], 0
      %s90 = sshll.u32 %s5, 4
      %s91 = int_to_ptr.hbm [resolvable:$true] %s90
      %s92 = sshll.u32 [#allocation11], 4
      %s93 = int_to_ptr.vmem [resolvable:$true] %s92
      %98 = dma.hbm_to_vmem [thread:$0]  %s91, 3072, %s93, [#allocation12], 64, 64, 4
    $region25: #{tpu_custom_call.1} parent=1 // pred_fallthru
      _
    // Predicated region
    $region26: #{tpu_custom_call.1} parent=1 // pred_check
      _
    $region27: #{tpu_custom_call.1} parent=1 // pred_check_branch
      %100 = sbr.rel (0) target = $region29
    $region28: #{tpu_custom_call.1} parent=1 // pred_region
      _
    $region29: #{tpu_custom_call.1} parent=1 // pred_fallthru
      _
    // Predicated region
    $region30: #{tpu_custom_call.1} parent=1 // pred_check
      _
    $region31: #{tpu_custom_call.1} parent=1 // pred_check_branch
      %102 = sbr.rel (0) target = $region33
    $region32: #{tpu_custom_call.1} parent=1 // pred_region
      %104 = vsyncadd [#allocation12], 0
      %s105 = sshll.u32 %s7, 4
      %s106 = int_to_ptr.hbm [resolvable:$true] %s105
      %s107 = sshll.u32 [#allocation13], 4
      %s108 = int_to_ptr.vmem [resolvable:$true] %s107
      %113 = dma.hbm_to_vmem [thread:$0]  %s106, 3072, %s108, [#allocation12], 64, 64, 4
    $region33: #{tpu_custom_call.1} parent=1 // pred_fallthru
      _
    // Predicated region
    $region34: #{tpu_custom_call.1} parent=1 // pred_check
      _
    $region35: #{tpu_custom_call.1} parent=1 // pred_check_branch
      %115 = sbr.rel (0) target = $region37
    $region36: #{tpu_custom_call.1} parent=1 // pred_region
      _
    $region37: #{tpu_custom_call.1} parent=1 // pred_fallthru
      _
    // Predicated region
    $region38: #{tpu_custom_call.1} parent=1 // pred_check
      _
    $region39: #{tpu_custom_call.1} parent=1 // pred_check_branch
      %117 = sbr.rel (0) target = $region41
    $region40: #{tpu_custom_call.1} parent=1 // pred_region
      %119 = vsyncadd [#allocation15], 0
      %s120 = sshll.u32 %s9, 4
      %s121 = int_to_ptr.hbm [resolvable:$true] %s120
      %s122 = sshll.u32 [#allocation14], 4
      %s123 = int_to_ptr.vmem [resolvable:$true] %s122
      %128 = dma.hbm_to_vmem [thread:$0]  %s121, 48, %s123, [#allocation15], 16, 16, 1
    $region41: #{tpu_custom_call.1} parent=1 // pred_fallthru
      _
    // Predicated region
    $region42: #{tpu_custom_call.1} parent=1 // pred_check
      _
    $region43: #{tpu_custom_call.1} parent=1 // pred_check_branch
      %130 = sbr.rel (0) target = $region45
    $region44: #{tpu_custom_call.1} parent=1 // pred_region
      _
    $region45: #{tpu_custom_call.1} parent=1 // pred_fallthru
      _
    // Predicated region
    $region46: #{tpu_custom_call.1} parent=1 // pred_check
      _
    $region47: #{tpu_custom_call.1} parent=1 // pred_check_branch
      %132 = sbr.rel (0) target = $region49
    $region48: #{tpu_custom_call.1} parent=1 // pred_region
      %134 = vsyncadd [#allocation15], 0
      %s135 = sshll.u32 %s11, 4
      %s136 = int_to_ptr.hbm [resolvable:$true] %s135
      %s137 = sshll.u32 [#allocation16], 4
      %s138 = int_to_ptr.vmem [resolvable:$true] %s137
      %143 = dma.hbm_to_vmem [thread:$0]  %s136, 3072, %s138, [#allocation15], 64, 64, 4
    $region49: #{tpu_custom_call.1} parent=1 // pred_fallthru
      _
    // Predicated region
    $region50: #{tpu_custom_call.1} parent=1 // pred_check
      _
    $region51: #{tpu_custom_call.1} parent=1 // pred_check_branch
      %145 = sbr.rel (0) target = $region53
    $region52: #{tpu_custom_call.1} parent=1 // pred_region
      %147 = vsyncadd [#allocation18], 0
      %s148 = sshll.u32 %s12, 4
      %s149 = int_to_ptr.hbm [resolvable:$true] %s148
      %s150 = sshll.u32 [#allocation17], 4
      %s151 = int_to_ptr.vmem [resolvable:$true] %s150
      %156 = dma.hbm_to_vmem [thread:$0]  %s149, 48, %s151, [#allocation18], 16, 16, 1
    $region53: #{tpu_custom_call.1} parent=1 // pred_fallthru
      _
    // Predicated region
    $region54: #{tpu_custom_call.1} parent=1 // pred_check
      _
    $region55: #{tpu_custom_call.1} parent=1 // pred_check_branch
      %158 = sbr.rel (0) target = $region57
    $region56: #{tpu_custom_call.1} parent=1 // pred_region
      %160 = dma.done [#allocation3], 256
    $region57: #{tpu_custom_call.1} parent=1 // pred_fallthru
      _
    // Predicated region
    $region58: #{tpu_custom_call.1} parent=1 // pred_check
      _
    $region59: #{tpu_custom_call.1} parent=1 // pred_check_branch
      %162 = sbr.rel (0) target = $region61
    $region60: #{tpu_custom_call.1} parent=1 // pred_region
      %164 = dma.done [#allocation6], 128
    $region61: #{tpu_custom_call.1} parent=1 // pred_fallthru
      _
    // Predicated region
    $region62: #{tpu_custom_call.1} parent=1 // pred_check
      _
    $region63: #{tpu_custom_call.1} parent=1 // pred_check_branch
      %166 = sbr.rel (0) target = $region65
    $region64: #{tpu_custom_call.1} parent=1 // pred_region
      %168 = dma.done [#allocation6], 16
    $region65: #{tpu_custom_call.1} parent=1 // pred_fallthru
      _
    // Predicated region
    $region66: #{tpu_custom_call.1} parent=1 // pred_check
      _
    $region67: #{tpu_custom_call.1} parent=1 // pred_check_branch
      %170 = sbr.rel (0) target = $region69
    $region68: #{tpu_custom_call.1} parent=1 // pred_region
      %172 = dma.done [#allocation9], 1024
    $region69: #{tpu_custom_call.1} parent=1 // pred_fallthru
      _
    // Predicated region
    $region70: #{tpu_custom_call.1} parent=1 // pred_check
      _
    $region71: #{tpu_custom_call.1} parent=1 // pred_check_branch
      %174 = sbr.rel (0) target = $region73
    $region72: #{tpu_custom_call.1} parent=1 // pred_region
      %176 = dma.done [#allocation9], 16
    $region73: #{tpu_custom_call.1} parent=1 // pred_fallthru
      _
    // Predicated region
    $region74: #{tpu_custom_call.1} parent=1 // pred_check
      _
    $region75: #{tpu_custom_call.1} parent=1 // pred_check_branch
      %178 = sbr.rel (0) target = $region77
    $region76: #{tpu_custom_call.1} parent=1 // pred_region
      %180 = dma.done [#allocation12], 3072
    $region77: #{tpu_custom_call.1} parent=1 // pred_fallthru
      _
    // Predicated region
    $region78: #{tpu_custom_call.1} parent=1 // pred_check
      _
    $region79: #{tpu_custom_call.1} parent=1 // pred_check_branch
      %182 = sbr.rel (0) target = $region81
    $region80: #{tpu_custom_call.1} parent=1 // pred_region
      %184 = dma.done [#allocation12], 3072
    $region81: #{tpu_custom_call.1} parent=1 // pred_fallthru
      _
    // Predicated region
    $region82: #{tpu_custom_call.1} parent=1 // pred_check
      _
    $region83: #{tpu_custom_call.1} parent=1 // pred_check_branch
      %186 = sbr.rel (0) target = $region85
    $region84: #{tpu_custom_call.1} parent=1 // pred_region
      %188 = dma.done [#allocation15], 48
    $region85: #{tpu_custom_call.1} parent=1 // pred_fallthru
      _
    // Predicated region
    $region86: #{tpu_custom_call.1} parent=1 // pred_check
      _
    $region87: #{tpu_custom_call.1} parent=1 // pred_check_branch
      %190 = sbr.rel (0) target = $region89
    $region88: #{tpu_custom_call.1} parent=1 // pred_region
      %192 = dma.done [#allocation15], 3072
    $region89: #{tpu_custom_call.1} parent=1 // pred_fallthru
      _
    // Predicated region
    $region90: #{tpu_custom_call.1} parent=1 // pred_check
      _
    $region91: #{tpu_custom_call.1} parent=1 // pred_check_branch
      %194 = sbr.rel (0) target = $region93
    $region92: #{tpu_custom_call.1} parent=1 // pred_region
      %196 = dma.done [#allocation18], 48
    $region93: #{tpu_custom_call.1} parent=1 // pred_fallthru
      _
    %v198 = vld [vmem:[#allocation2] sm:$0xff]
    %v199 = vld [vmem:[#allocation2 + $0x8] sm:$0xff]
    %v200 = vpack.c.bf16 %v199, %v198
    %v201 = vld [vmem:[#allocation8] sm:$0xf]
    %v202 = vld [vmem:[#allocation8 + $0x4] sm:$0xf]
    %v203 = vld [vmem:[#allocation8 + $0x8] sm:$0xf]
    %v204 = vld [vmem:[#allocation8 + $0xc] sm:$0xf]
    %v205 = vld [vmem:[#allocation8 + $0x10] sm:$0xf]
    %v206 = vld [vmem:[#allocation8 + $0x14] sm:$0xf]
    %v207 = vld [vmem:[#allocation8 + $0x18] sm:$0xf]
    %v208 = vld [vmem:[#allocation8 + $0x1c] sm:$0xf]
    %v209 = vld [vmem:[#allocation8 + $0x20] sm:$0xf]
    %v210 = vld [vmem:[#allocation8 + $0x24] sm:$0xf]
    %v211 = vld [vmem:[#allocation8 + $0x28] sm:$0xf]
    %v212 = vld [vmem:[#allocation8 + $0x2c] sm:$0xf]
    %v213 = vld [vmem:[#allocation8 + $0x30] sm:$0xf]
    %v214 = vld [vmem:[#allocation8 + $0x34] sm:$0xf]
    %v215 = vld [vmem:[#allocation8 + $0x38] sm:$0xf]
    %v216 = vld [vmem:[#allocation8 + $0x3c] sm:$0xf]
    %v217 = vld [vmem:[#allocation10] sm:$0x1]
    %v219 = vperm.slane %v217, 0
    %v237 = vunpack.c.l.b16 %v201
    %v238 = vunpack.c.l.b16 %v202
    %v239 = vunpack.c.l.b16 %v203
    %v240 = vunpack.c.l.b16 %v204
    %v241 = vunpack.c.l.b16 %v205
    %v242 = vunpack.c.l.b16 %v206
    %v243 = vunpack.c.l.b16 %v207
    %v244 = vunpack.c.l.b16 %v208
    %v245 = vunpack.c.l.b16 %v209
    %v246 = vunpack.c.l.b16 %v210
    %v247 = vunpack.c.l.b16 %v211
    %v248 = vunpack.c.l.b16 %v212
    %v249 = vunpack.c.l.b16 %v213
    %v250 = vunpack.c.l.b16 %v214
    %v251 = vunpack.c.l.b16 %v215
    %v252 = vunpack.c.l.b16 %v216
    %v253 = vpack.c.b16 %v238, %v237
    %v254 = vpack.c.b16 %v240, %v239
    %v255 = vpack.c.b16 %v242, %v241
    %v256 = vpack.c.b16 %v244, %v243
    %v257 = vpack.c.b16 %v246, %v245
    %v258 = vpack.c.b16 %v248, %v247
    %v259 = vpack.c.b16 %v250, %v249
    %v260 = vpack.c.b16 %v252, %v251
    %269 = vmatpush.bf16.msra.mxu0 %v260
    %270 = vmatpush.bf16.msra.mxu0 %v259
    %271 = vmatpush.bf16.msra.mxu0 %v258
    %272 = vmatpush.bf16.msra.mxu0 %v257
    %273 = vmatpush.bf16.msra.mxu0 %v256
    %274 = vmatpush.bf16.msra.mxu0 %v255
    %275 = vmatpush.bf16.msra.mxu0 %v254
    %276 = vmatpush.bf16.msra.mxu0 %v253
    %277 = vmatmul.bf16.gmra.mxu0 %v200
    %v278 = vpop.f32.mrf.mxu0
    %v279 = vadd.f32 %v219, %v278
    %v280 = vpop.f32.mrf.mxu0
    %v281 = vadd.f32 %v219, %v280
    %282 = vdwg.mxu0
    %v283 = vld [vmem:[#allocation5] sm:$0xf]
    %v284 = vld [vmem:[#allocation5 + $0x4] sm:$0xf]
    %v285 = vld [vmem:[#allocation7] sm:$0x1]
    %v286 = vpack.c.bf16 %v281, %v279
    %v289 = vunpack.c.l.b16 %v283
    %v290 = vunpack.c.l.b16 %v284
    %v291 = vpack.c.b16 %v290, %v289
    %vm292 = vcmask 130048
    %v294 = vsel %vm292, %v291, 0
    %296 = vmatpush.bf16.msra.mxu0 0
    %297 = vmatpush.bf16.msra.mxu0 0
    %298 = vmatpush.bf16.msra.mxu0 0
    %299 = vmatpush.bf16.msra.mxu0 0
    %300 = vmatpush.bf16.msra.mxu0 0
    %301 = vmatpush.bf16.msra.mxu0 0
    %302 = vmatpush.bf16.msra.mxu0 0
    %303 = vmatpush.bf16.msra.mxu0 %v286
    %304 = vmatmul.bf16.gmra.mxu0 %v294
    %v305 = vpop.f32.mrf.mxu0
    %v306 = vadd.f32 0.0, %v305
    %v307 = vpop.f32.mrf.mxu0
    %v308 = vadd.f32 0.0, %v307
    %309 = vdwg.mxu0
    %v310 = vadd.f32 %v279, %v306
    %v311 = vadd.f32 %v281, %v308
    %v312 = vpack.c.bf16 %v311, %v310
    %v313 = vld [vmem:[#allocation11] sm:$0xf]
    %v314 = vld [vmem:[#allocation11 + $0x4] sm:$0xf]
    %v315 = vld [vmem:[#allocation11 + $0x8] sm:$0xf]
    %v316 = vld [vmem:[#allocation11 + $0xc] sm:$0xf]
    %v317 = vld [vmem:[#allocation11 + $0x10] sm:$0xf]
    %v318 = vld [vmem:[#allocation11 + $0x14] sm:$0xf]
    %v319 = vld [vmem:[#allocation11 + $0x18] sm:$0xf]
    %v320 = vld [vmem:[#allocation11 + $0x1c] sm:$0xf]
    %v321 = vld [vmem:[#allocation11 + $0x20] sm:$0xf]
    %v322 = vld [vmem:[#allocation11 + $0x24] sm:$0xf]
    %v323 = vld [vmem:[#allocation11 + $0x28] sm:$0xf]
    %v324 = vld [vmem:[#allocation11 + $0x2c] sm:$0xf]
    %v325 = vld [vmem:[#allocation11 + $0x30] sm:$0xf]
    %v326 = vld [vmem:[#allocation11 + $0x34] sm:$0xf]
    %v327 = vld [vmem:[#allocation11 + $0x38] sm:$0xf]
    %v328 = vld [vmem:[#allocation11 + $0x3c] sm:$0xf]
    %v329 = vld [vmem:[%s6] sm:$0x1]
    %v331 = vperm.slane %v329, 0
    %v349 = vunpack.c.l.b16 %v313
    %v350 = vunpack.c.l.b16 %v314
    %v351 = vunpack.c.l.b16 %v315
    %v352 = vunpack.c.l.b16 %v316
    %v353 = vunpack.c.l.b16 %v317
    %v354 = vunpack.c.l.b16 %v318
    %v355 = vunpack.c.l.b16 %v319
    %v356 = vunpack.c.l.b16 %v320
    %v357 = vunpack.c.l.b16 %v321
    %v358 = vunpack.c.l.b16 %v322
    %v359 = vunpack.c.l.b16 %v323
    %v360 = vunpack.c.l.b16 %v324
    %v361 = vunpack.c.l.b16 %v325
    %v362 = vunpack.c.l.b16 %v326
    %v363 = vunpack.c.l.b16 %v327
    %v364 = vunpack.c.l.b16 %v328
    %v365 = vpack.c.b16 %v350, %v349
    %v366 = vpack.c.b16 %v352, %v351
    %v367 = vpack.c.b16 %v354, %v353
    %v368 = vpack.c.b16 %v356, %v355
    %v369 = vpack.c.b16 %v358, %v357
    %v370 = vpack.c.b16 %v360, %v359
    %v371 = vpack.c.b16 %v362, %v361
    %v372 = vpack.c.b16 %v364, %v363
    %381 = vmatpush.bf16.msra.mxu0 %v372
    %382 = vmatpush.bf16.msra.mxu0 %v371
    %383 = vmatpush.bf16.msra.mxu0 %v370
    %384 = vmatpush.bf16.msra.mxu0 %v369
    %385 = vmatpush.bf16.msra.mxu0 %v368
    %386 = vmatpush.bf16.msra.mxu0 %v367
    %387 = vmatpush.bf16.msra.mxu0 %v366
    %388 = vmatpush.bf16.msra.mxu0 %v365
    %389 = vmatmul.bf16.gmra.mxu0 %v312
    %v390 = vpop.f32.mrf.mxu0
    %v391 = vadd.f32 %v331, %v390
    %v392 = vpop.f32.mrf.mxu0
    %v393 = vadd.f32 %v331, %v392
    %394 = vdwg.mxu0
    %v395 = vmax.f32 %v391, 0.0
    %v396 = vmax.f32 %v393, 0.0
    %v397 = vpack.c.bf16 %v396, %v395
    %v398 = vld [vmem:[#allocation13] sm:$0xf]
    %v399 = vld [vmem:[#allocation13 + $0x4] sm:$0xf]
    %v400 = vld [vmem:[#allocation13 + $0x8] sm:$0xf]
    %v401 = vld [vmem:[#allocation13 + $0xc] sm:$0xf]
    %v402 = vld [vmem:[#allocation13 + $0x10] sm:$0xf]
    %v403 = vld [vmem:[#allocation13 + $0x14] sm:$0xf]
    %v404 = vld [vmem:[#allocation13 + $0x18] sm:$0xf]
    %v405 = vld [vmem:[#allocation13 + $0x1c] sm:$0xf]
    %v406 = vld [vmem:[#allocation13 + $0x20] sm:$0xf]
    %v407 = vld [vmem:[#allocation13 + $0x24] sm:$0xf]
    %v408 = vld [vmem:[#allocation13 + $0x28] sm:$0xf]
    %v409 = vld [vmem:[#allocation13 + $0x2c] sm:$0xf]
    %v410 = vld [vmem:[#allocation13 + $0x30] sm:$0xf]
    %v411 = vld [vmem:[#allocation13 + $0x34] sm:$0xf]
    %v412 = vld [vmem:[#allocation13 + $0x38] sm:$0xf]
    %v413 = vld [vmem:[#allocation13 + $0x3c] sm:$0xf]
    %v414 = vld [vmem:[%s8] sm:$0x1]
    %v416 = vperm.slane %v414, 0
    %v434 = vunpack.c.l.b16 %v398
    %v435 = vunpack.c.l.b16 %v399
    %v436 = vunpack.c.l.b16 %v400
    %v437 = vunpack.c.l.b16 %v401
    %v438 = vunpack.c.l.b16 %v402
    %v439 = vunpack.c.l.b16 %v403
    %v440 = vunpack.c.l.b16 %v404
    %v441 = vunpack.c.l.b16 %v405
    %v442 = vunpack.c.l.b16 %v406
    %v443 = vunpack.c.l.b16 %v407
    %v444 = vunpack.c.l.b16 %v408
    %v445 = vunpack.c.l.b16 %v409
    %v446 = vunpack.c.l.b16 %v410
    %v447 = vunpack.c.l.b16 %v411
    %v448 = vunpack.c.l.b16 %v412
    %v449 = vunpack.c.l.b16 %v413
    %v450 = vpack.c.b16 %v435, %v434
    %v451 = vpack.c.b16 %v437, %v436
    %v452 = vpack.c.b16 %v439, %v438
    %v453 = vpack.c.b16 %v441, %v440
    %v454 = vpack.c.b16 %v443, %v442
    %v455 = vpack.c.b16 %v445, %v444
    %v456 = vpack.c.b16 %v447, %v446
    %v457 = vpack.c.b16 %v449, %v448
    %466 = vmatpush.bf16.msra.mxu0 %v457
    %467 = vmatpush.bf16.msra.mxu0 %v456
    %468 = vmatpush.bf16.msra.mxu0 %v455
    %469 = vmatpush.bf16.msra.mxu0 %v454
    %470 = vmatpush.bf16.msra.mxu0 %v453
    %471 = vmatpush.bf16.msra.mxu0 %v452
    %472 = vmatpush.bf16.msra.mxu0 %v451
    %473 = vmatpush.bf16.msra.mxu0 %v450
    %474 = vmatmul.bf16.gmra.mxu0 %v397
    %v475 = vpop.f32.mrf.mxu0
    %v476 = vadd.f32 %v416, %v475
    %v477 = vpop.f32.mrf.mxu0
    %v478 = vadd.f32 %v416, %v477
    %479 = vdwg.mxu0
    %v480 = vadd.f32 %v476, %v478
    %v481 = vrot.slane %v480, 4
    %v482 = vadd.f32 %v480, %v481
    %v483 = vrot.slane %v482, 2
    %v484 = vadd.f32 %v482, %v483
    %v485 = vrot.slane %v484, 1
    %v486 = vadd.f32 %v484, %v485
    %v487 = vrcp.pop 16.0
    %v488 = vmul.f32 16.0, %v487
    %v489 = vsub.f32 1.0, %v488
    %v490 = vmul.f32 %v487, %v489
    %v491 = vadd.f32 %v487, %v490
    %vm492 = vweird.f32 %v487
    %v493 = vsel %vm492, %v487, %v491
    %v494 = vmul.f32 %v486, %v493
    %v495 = vsub.f32 %v476, %v494
    %v496 = vsub.f32 %v478, %v494
    %v497 = vmul.f32 %v495, %v495
    %v498 = vmul.f32 %v496, %v496
    %v499 = vadd.f32 %v497, %v498
    %v500 = vrot.slane %v499, 4
    %v501 = vadd.f32 %v499, %v500
    %v502 = vrot.slane %v501, 2
    %v503 = vadd.f32 %v501, %v502
    %v504 = vrot.slane %v503, 1
    %v505 = vadd.f32 %v503, %v504
    %v506 = vmul.f32 %v505, %v493
    %v507 = vadd.f32 %v506, 1e-05
    %v508 = vrsqrt.pop %v507
    %v509 = vmul.f32 %v508, %v507
    %v510 = vmul.f32 %v509, %v508
    %v511 = vmul.f32 0.5, %v510
    %v512 = vsub.f32 1.5, %v511
    %v513 = vmul.f32 %v508, %v512
    %vm514 = vweird.f32 %v507
    %vm515 = vweird.f32 %v508
    %vm516 = vmor %vm514, %vm515
    %v517 = vsel %vm516, %v508, %v513
    %v518 = vmul.f32 %v495, %v517
    %v519 = vmul.f32 %v496, %v517
    %v520 = vld [vmem:[#allocation14] sm:$0x1]
    %v522 = vperm.slane %v520, 0
    %v524 = vmul.f32 %v518, %v522
    %v525 = vmul.f32 %v519, %v522
    %v526 = vld [vmem:[%s10] sm:$0x1]
    %v528 = vperm.slane %v526, 0
    %v530 = vadd.f32 %v524, %v528
    %v531 = vadd.f32 %v525, %v528
    %v532 = vmax.f32 %v530, 0.0
    %v533 = vmax.f32 %v531, 0.0
    %v534 = vadd.f32 %v532, %v279
    %v535 = vadd.f32 %v533, %v281
    %v536 = vpack.c.bf16 %v535, %v534
    %v538 = vsel %vm292, %v285, 0
    %540 = vmatpush.bf16.msra.mxu0 0
    %541 = vmatpush.bf16.msra.mxu0 0
    %542 = vmatpush.bf16.msra.mxu0 0
    %543 = vmatpush.bf16.msra.mxu0 0
    %544 = vmatpush.bf16.msra.mxu0 0
    %545 = vmatpush.bf16.msra.mxu0 0
    %546 = vmatpush.bf16.msra.mxu0 0
    %547 = vmatpush.bf16.msra.mxu0 %v536
    %548 = vmatmul.bf16.gmra.mxu0 %v538
    %v549 = vpop.f32.mrf.mxu0
    %v550 = vadd.f32 0.0, %v549
    %v551 = vpop.f32.mrf.mxu0
    %552 = vdwg.mxu0
    %v553 = vpack.c.bf16 %v550, %v550
    %v554 = vld [vmem:[#allocation16] sm:$0xf]
    %v555 = vld [vmem:[#allocation16 + $0x4] sm:$0xf]
    %v556 = vld [vmem:[#allocation16 + $0x8] sm:$0xf]
    %v557 = vld [vmem:[#allocation16 + $0xc] sm:$0xf]
    %v558 = vld [vmem:[#allocation16 + $0x10] sm:$0xf]
    %v559 = vld [vmem:[#allocation16 + $0x14] sm:$0xf]
    %v560 = vld [vmem:[#allocation16 + $0x18] sm:$0xf]
    %v561 = vld [vmem:[#allocation16 + $0x1c] sm:$0xf]
    %v562 = vld [vmem:[#allocation16 + $0x20] sm:$0xf]
    %v563 = vld [vmem:[#allocation16 + $0x24] sm:$0xf]
    %v564 = vld [vmem:[#allocation16 + $0x28] sm:$0xf]
    %v565 = vld [vmem:[#allocation16 + $0x2c] sm:$0xf]
    %v566 = vld [vmem:[#allocation16 + $0x30] sm:$0xf]
    %v567 = vld [vmem:[#allocation16 + $0x34] sm:$0xf]
    %v568 = vld [vmem:[#allocation16 + $0x38] sm:$0xf]
    %v569 = vld [vmem:[#allocation16 + $0x3c] sm:$0xf]
    %v570 = vld [vmem:[#allocation17] sm:$0x1]
    %v572 = vperm.slane %v570, 0
    %v590 = vunpack.c.l.b16 %v554
    %v591 = vunpack.c.l.b16 %v555
    %v592 = vunpack.c.l.b16 %v556
    %v593 = vunpack.c.l.b16 %v557
    %v594 = vunpack.c.l.b16 %v558
    %v595 = vunpack.c.l.b16 %v559
    %v596 = vunpack.c.l.b16 %v560
    %v597 = vunpack.c.l.b16 %v561
    %v598 = vunpack.c.l.b16 %v562
    %v599 = vunpack.c.l.b16 %v563
    %v600 = vunpack.c.l.b16 %v564
    %v601 = vunpack.c.l.b16 %v565
    %v602 = vunpack.c.l.b16 %v566
    %v603 = vunpack.c.l.b16 %v567
    %v604 = vunpack.c.l.b16 %v568
    %v605 = vunpack.c.l.b16 %v569
    %v606 = vpack.c.b16 %v591, %v590
    %v607 = vpack.c.b16 %v593, %v592
    %v608 = vpack.c.b16 %v595, %v594
    %v609 = vpack.c.b16 %v597, %v596
    %v610 = vpack.c.b16 %v599, %v598
    %v611 = vpack.c.b16 %v601, %v600
    %v612 = vpack.c.b16 %v603, %v602
    %v613 = vpack.c.b16 %v605, %v604
    %622 = vmatpush.bf16.msra.mxu0 %v613
    %623 = vmatpush.bf16.msra.mxu0 %v612
    %624 = vmatpush.bf16.msra.mxu0 %v611
    %625 = vmatpush.bf16.msra.mxu0 %v610
    %626 = vmatpush.bf16.msra.mxu0 %v609
    %627 = vmatpush.bf16.msra.mxu0 %v608
    %628 = vmatpush.bf16.msra.mxu0 %v607
    %629 = vmatpush.bf16.msra.mxu0 %v606
    %630 = vmatmul.bf16.gmra.mxu0 %v553
    %v631 = vpop.f32.mrf.mxu0
    %v632 = vadd.f32 %v572, %v631
    %v633 = vpop.f32.mrf.mxu0
    %634 = vdwg.mxu0
    %v635 = vadd.f32 %v632, 0.0
    %636 = vmatpush.bf16.msra.mxu0 0
    %637 = vmatpush.bf16.msra.mxu0 0
    %638 = vmatpush.bf16.msra.mxu0 0
    %639 = vmatpush.bf16.msra.mxu0 0
    %640 = vmatpush.bf16.msra.mxu0 0
    %641 = vmatpush.bf16.msra.mxu0 0
    %642 = vmatpush.bf16.msra.mxu0 0
    %643 = vmatpush.bf16.msra.mxu0 %v536
    %644 = vmatmul.bf16.gmra.mxu0 %v294
    %v645 = vpop.f32.mrf.mxu0
    %v646 = vadd.f32 0.0, %v645
    %v647 = vpop.f32.mrf.mxu0
    %v648 = vadd.f32 0.0, %v647
    %649 = vdwg.mxu0
    %v650 = vadd.f32 %v534, %v646
    %v651 = vadd.f32 %v535, %v648
    %v652 = vpack.c.bf16 %v651, %v650
    %s653 = scalar_lea.vmem [#allocation11], 64
    %v654 = vld [vmem:[%s653] sm:$0xf]
    %v655 = vld [vmem:[%s653 + $0x4] sm:$0xf]
    %v656 = vld [vmem:[%s653 + $0x8] sm:$0xf]
    %v657 = vld [vmem:[%s653 + $0xc] sm:$0xf]
    %v658 = vld [vmem:[%s653 + $0x10] sm:$0xf]
    %v659 = vld [vmem:[%s653 + $0x14] sm:$0xf]
    %v660 = vld [vmem:[%s653 + $0x18] sm:$0xf]
    %v661 = vld [vmem:[%s653 + $0x1c] sm:$0xf]
    %v662 = vld [vmem:[%s653 + $0x20] sm:$0xf]
    %v663 = vld [vmem:[%s653 + $0x24] sm:$0xf]
    %v664 = vld [vmem:[%s653 + $0x28] sm:$0xf]
    %v665 = vld [vmem:[%s653 + $0x2c] sm:$0xf]
    %v666 = vld [vmem:[%s653 + $0x30] sm:$0xf]
    %v667 = vld [vmem:[%s653 + $0x34] sm:$0xf]
    %v668 = vld [vmem:[%s653 + $0x38] sm:$0xf]
    %v669 = vld [vmem:[%s653 + $0x3c] sm:$0xf]
    %s670 = scalar_lea.vmem %s6, 1
    %v671 = vld [vmem:[%s670] sm:$0x1]
    %v673 = vperm.slane %v671, 0
    %v691 = vunpack.c.l.b16 %v654
    %v692 = vunpack.c.l.b16 %v655
    %v693 = vunpack.c.l.b16 %v656
    %v694 = vunpack.c.l.b16 %v657
    %v695 = vunpack.c.l.b16 %v658
    %v696 = vunpack.c.l.b16 %v659
    %v697 = vunpack.c.l.b16 %v660
    %v698 = vunpack.c.l.b16 %v661
    %v699 = vunpack.c.l.b16 %v662
    %v700 = vunpack.c.l.b16 %v663
    %v701 = vunpack.c.l.b16 %v664
    %v702 = vunpack.c.l.b16 %v665
    %v703 = vunpack.c.l.b16 %v666
    %v704 = vunpack.c.l.b16 %v667
    %v705 = vunpack.c.l.b16 %v668
    %v706 = vunpack.c.l.b16 %v669
    %v707 = vpack.c.b16 %v692, %v691
    %v708 = vpack.c.b16 %v694, %v693
    %v709 = vpack.c.b16 %v696, %v695
    %v710 = vpack.c.b16 %v698, %v697
    %v711 = vpack.c.b16 %v700, %v699
    %v712 = vpack.c.b16 %v702, %v701
    %v713 = vpack.c.b16 %v704, %v703
    %v714 = vpack.c.b16 %v706, %v705
    %723 = vmatpush.bf16.msra.mxu0 %v714
    %724 = vmatpush.bf16.msra.mxu0 %v713
    %725 = vmatpush.bf16.msra.mxu0 %v712
    %726 = vmatpush.bf16.msra.mxu0 %v711
    %727 = vmatpush.bf16.msra.mxu0 %v710
    %728 = vmatpush.bf16.msra.mxu0 %v709
    %729 = vmatpush.bf16.msra.mxu0 %v708
    %730 = vmatpush.bf16.msra.mxu0 %v707
    %731 = vmatmul.bf16.gmra.mxu0 %v652
    %v732 = vpop.f32.mrf.mxu0
    %v733 = vadd.f32 %v673, %v732
    %v734 = vpop.f32.mrf.mxu0
    %v735 = vadd.f32 %v673, %v734
    %736 = vdwg.mxu0
    %v737 = vmax.f32 %v733, 0.0
    %v738 = vmax.f32 %v735, 0.0
    %v739 = vpack.c.bf16 %v738, %v737
    %s740 = scalar_lea.vmem [#allocation13], 64
    %v741 = vld [vmem:[%s740] sm:$0xf]
    %v742 = vld [vmem:[%s740 + $0x4] sm:$0xf]
    %v743 = vld [vmem:[%s740 + $0x8] sm:$0xf]
    %v744 = vld [vmem:[%s740 + $0xc] sm:$0xf]
    %v745 = vld [vmem:[%s740 + $0x10] sm:$0xf]
    %v746 = vld [vmem:[%s740 + $0x14] sm:$0xf]
    %v747 = vld [vmem:[%s740 + $0x18] sm:$0xf]
    %v748 = vld [vmem:[%s740 + $0x1c] sm:$0xf]
    %v749 = vld [vmem:[%s740 + $0x20] sm:$0xf]
    %v750 = vld [vmem:[%s740 + $0x24] sm:$0xf]
    %v751 = vld [vmem:[%s740 + $0x28] sm:$0xf]
    %v752 = vld [vmem:[%s740 + $0x2c] sm:$0xf]
    %v753 = vld [vmem:[%s740 + $0x30] sm:$0xf]
    %v754 = vld [vmem:[%s740 + $0x34] sm:$0xf]
    %v755 = vld [vmem:[%s740 + $0x38] sm:$0xf]
    %v756 = vld [vmem:[%s740 + $0x3c] sm:$0xf]
    %s757 = scalar_lea.vmem %s8, 1
    %v758 = vld [vmem:[%s757] sm:$0x1]
    %v760 = vperm.slane %v758, 0
    %v778 = vunpack.c.l.b16 %v741
    %v779 = vunpack.c.l.b16 %v742
    %v780 = vunpack.c.l.b16 %v743
    %v781 = vunpack.c.l.b16 %v744
    %v782 = vunpack.c.l.b16 %v745
    %v783 = vunpack.c.l.b16 %v746
    %v784 = vunpack.c.l.b16 %v747
    %v785 = vunpack.c.l.b16 %v748
    %v786 = vunpack.c.l.b16 %v749
    %v787 = vunpack.c.l.b16 %v750
    %v788 = vunpack.c.l.b16 %v751
    %v789 = vunpack.c.l.b16 %v752
    %v790 = vunpack.c.l.b16 %v753
    %v791 = vunpack.c.l.b16 %v754
    %v792 = vunpack.c.l.b16 %v755
    %v793 = vunpack.c.l.b16 %v756
    %v794 = vpack.c.b16 %v779, %v778
    %v795 = vpack.c.b16 %v781, %v780
    %v796 = vpack.c.b16 %v783, %v782
    %v797 = vpack.c.b16 %v785, %v784
    %v798 = vpack.c.b16 %v787, %v786
    %v799 = vpack.c.b16 %v789, %v788
    %v800 = vpack.c.b16 %v791, %v790
    %v801 = vpack.c.b16 %v793, %v792
    %810 = vmatpush.bf16.msra.mxu0 %v801
    %811 = vmatpush.bf16.msra.mxu0 %v800
    %812 = vmatpush.bf16.msra.mxu0 %v799
    %813 = vmatpush.bf16.msra.mxu0 %v798
    %814 = vmatpush.bf16.msra.mxu0 %v797
    %815 = vmatpush.bf16.msra.mxu0 %v796
    %816 = vmatpush.bf16.msra.mxu0 %v795
    %817 = vmatpush.bf16.msra.mxu0 %v794
    %818 = vmatmul.bf16.gmra.mxu0 %v739
    %v819 = vpop.f32.mrf.mxu0
    %v820 = vadd.f32 %v760, %v819
    %v821 = vpop.f32.mrf.mxu0
    %v822 = vadd.f32 %v760, %v821
    %823 = vdwg.mxu0
    %v824 = vadd.f32 %v820, %v822
    %v825 = vrot.slane %v824, 4
    %v826 = vadd.f32 %v824, %v825
    %v827 = vrot.slane %v826, 2
    %v828 = vadd.f32 %v826, %v827
    %v829 = vrot.slane %v828, 1
    %v830 = vadd.f32 %v828, %v829
    %v831 = vmul.f32 %v830, %v493
    %v832 = vsub.f32 %v820, %v831
    %v833 = vsub.f32 %v822, %v831
    %v834 = vmul.f32 %v832, %v832
    %v835 = vmul.f32 %v833, %v833
    %v836 = vadd.f32 %v834, %v835
    %v837 = vrot.slane %v836, 4
    %v838 = vadd.f32 %v836, %v837
    %v839 = vrot.slane %v838, 2
    %v840 = vadd.f32 %v838, %v839
    %v841 = vrot.slane %v840, 1
    %v842 = vadd.f32 %v840, %v841
    %v843 = vmul.f32 %v842, %v493
    %v844 = vadd.f32 %v843, 1e-05
    %v845 = vrsqrt.pop %v844
    %v846 = vmul.f32 %v845, %v844
    %v847 = vmul.f32 %v846, %v845
    %v848 = vmul.f32 0.5, %v847
    %v849 = vsub.f32 1.5, %v848
    %v850 = vmul.f32 %v845, %v849
    %vm851 = vweird.f32 %v844
    %vm852 = vweird.f32 %v845
    %vm853 = vmor %vm851, %vm852
    %v854 = vsel %vm853, %v845, %v850
    %v855 = vmul.f32 %v832, %v854
    %v856 = vmul.f32 %v833, %v854
    %s857 = scalar_lea.vmem [#allocation14], 1
    %v858 = vld [vmem:[%s857] sm:$0x1]
    %v860 = vperm.slane %v858, 0
    %v862 = vmul.f32 %v855, %v860
    %v863 = vmul.f32 %v856, %v860
    %s864 = scalar_lea.vmem %s10, 1
    %v865 = vld [vmem:[%s864] sm:$0x1]
    %v867 = vperm.slane %v865, 0
    %v869 = vadd.f32 %v862, %v867
    %v870 = vadd.f32 %v863, %v867
    %v871 = vmax.f32 %v869, 0.0
    %v872 = vmax.f32 %v870, 0.0
    %v873 = vadd.f32 %v871, %v534
    %v874 = vadd.f32 %v872, %v535
    %v875 = vpack.c.bf16 %v874, %v873
    %876 = vmatpush.bf16.msra.mxu0 0
    %877 = vmatpush.bf16.msra.mxu0 0
    %878 = vmatpush.bf16.msra.mxu0 0
    %879 = vmatpush.bf16.msra.mxu0 0
    %880 = vmatpush.bf16.msra.mxu0 0
    %881 = vmatpush.bf16.msra.mxu0 0
    %882 = vmatpush.bf16.msra.mxu0 0
    %883 = vmatpush.bf16.msra.mxu0 %v875
    %884 = vmatmul.bf16.gmra.mxu0 %v538
    %v885 = vpop.f32.mrf.mxu0
    %v886 = vadd.f32 0.0, %v885
    %v887 = vpop.f32.mrf.mxu0
    %888 = vdwg.mxu0
    %v889 = vpack.c.bf16 %v886, %v886
    %s890 = scalar_lea.vmem [#allocation16], 64
    %v891 = vld [vmem:[%s890] sm:$0xf]
    %v892 = vld [vmem:[%s890 + $0x4] sm:$0xf]
    %v893 = vld [vmem:[%s890 + $0x8] sm:$0xf]
    %v894 = vld [vmem:[%s890 + $0xc] sm:$0xf]
    %v895 = vld [vmem:[%s890 + $0x10] sm:$0xf]
    %v896 = vld [vmem:[%s890 + $0x14] sm:$0xf]
    %v897 = vld [vmem:[%s890 + $0x18] sm:$0xf]
    %v898 = vld [vmem:[%s890 + $0x1c] sm:$0xf]
    %v899 = vld [vmem:[%s890 + $0x20] sm:$0xf]
    %v900 = vld [vmem:[%s890 + $0x24] sm:$0xf]
    %v901 = vld [vmem:[%s890 + $0x28] sm:$0xf]
    %v902 = vld [vmem:[%s890 + $0x2c] sm:$0xf]
    %v903 = vld [vmem:[%s890 + $0x30] sm:$0xf]
    %v904 = vld [vmem:[%s890 + $0x34] sm:$0xf]
    %v905 = vld [vmem:[%s890 + $0x38] sm:$0xf]
    %v906 = vld [vmem:[%s890 + $0x3c] sm:$0xf]
    %s907 = scalar_lea.vmem [#allocation17], 1
    %v908 = vld [vmem:[%s907] sm:$0x1]
    %v910 = vperm.slane %v908, 0
    %v928 = vunpack.c.l.b16 %v891
    %v929 = vunpack.c.l.b16 %v892
    %v930 = vunpack.c.l.b16 %v893
    %v931 = vunpack.c.l.b16 %v894
    %v932 = vunpack.c.l.b16 %v895
    %v933 = vunpack.c.l.b16 %v896
    %v934 = vunpack.c.l.b16 %v897
    %v935 = vunpack.c.l.b16 %v898
    %v936 = vunpack.c.l.b16 %v899
    %v937 = vunpack.c.l.b16 %v900
    %v938 = vunpack.c.l.b16 %v901
    %v939 = vunpack.c.l.b16 %v902
    %v940 = vunpack.c.l.b16 %v903
    %v941 = vunpack.c.l.b16 %v904
    %v942 = vunpack.c.l.b16 %v905
    %v943 = vunpack.c.l.b16 %v906
    %v944 = vpack.c.b16 %v929, %v928
    %v945 = vpack.c.b16 %v931, %v930
    %v946 = vpack.c.b16 %v933, %v932
    %v947 = vpack.c.b16 %v935, %v934
    %v948 = vpack.c.b16 %v937, %v936
    %v949 = vpack.c.b16 %v939, %v938
    %v950 = vpack.c.b16 %v941, %v940
    %v951 = vpack.c.b16 %v943, %v942
    %960 = vmatpush.bf16.msra.mxu0 %v951
    %961 = vmatpush.bf16.msra.mxu0 %v950
    %962 = vmatpush.bf16.msra.mxu0 %v949
    %963 = vmatpush.bf16.msra.mxu0 %v948
    %964 = vmatpush.bf16.msra.mxu0 %v947
    %965 = vmatpush.bf16.msra.mxu0 %v946
    %966 = vmatpush.bf16.msra.mxu0 %v945
    %967 = vmatpush.bf16.msra.mxu0 %v944
    %968 = vmatmul.bf16.gmra.mxu0 %v889
    %v969 = vpop.f32.mrf.mxu0
    %v970 = vadd.f32 %v910, %v969
    %v971 = vpop.f32.mrf.mxu0
    %972 = vdwg.mxu0
    %v973 = vadd.f32 %v635, %v970
    %974 = vmatpush.bf16.msra.mxu0 0
    %975 = vmatpush.bf16.msra.mxu0 0
    %976 = vmatpush.bf16.msra.mxu0 0
    %977 = vmatpush.bf16.msra.mxu0 0
    %978 = vmatpush.bf16.msra.mxu0 0
    %979 = vmatpush.bf16.msra.mxu0 0
    %980 = vmatpush.bf16.msra.mxu0 0
    %981 = vmatpush.bf16.msra.mxu0 %v875
    %982 = vmatmul.bf16.gmra.mxu0 %v294
    %v983 = vpop.f32.mrf.mxu0
    %v984 = vadd.f32 0.0, %v983
    %v985 = vpop.f32.mrf.mxu0
    %v986 = vadd.f32 0.0, %v985
    %987 = vdwg.mxu0
    %v988 = vadd.f32 %v873, %v984
    %v989 = vadd.f32 %v874, %v986
    %v990 = vpack.c.bf16 %v989, %v988
    %s991 = scalar_lea.vmem [#allocation11], 128
    %v992 = vld [vmem:[%s991] sm:$0xf]
    %v993 = vld [vmem:[%s991 + $0x4] sm:$0xf]
    %v994 = vld [vmem:[%s991 + $0x8] sm:$0xf]
    %v995 = vld [vmem:[%s991 + $0xc] sm:$0xf]
    %v996 = vld [vmem:[%s991 + $0x10] sm:$0xf]
    %v997 = vld [vmem:[%s991 + $0x14] sm:$0xf]
    %v998 = vld [vmem:[%s991 + $0x18] sm:$0xf]
    %v999 = vld [vmem:[%s991 + $0x1c] sm:$0xf]
    %v1000 = vld [vmem:[%s991 + $0x20] sm:$0xf]
    %v1001 = vld [vmem:[%s991 + $0x24] sm:$0xf]
    %v1002 = vld [vmem:[%s991 + $0x28] sm:$0xf]
    %v1003 = vld [vmem:[%s991 + $0x2c] sm:$0xf]
    %v1004 = vld [vmem:[%s991 + $0x30] sm:$0xf]
    %v1005 = vld [vmem:[%s991 + $0x34] sm:$0xf]
    %v1006 = vld [vmem:[%s991 + $0x38] sm:$0xf]
    %v1007 = vld [vmem:[%s991 + $0x3c] sm:$0xf]
    %s1008 = scalar_lea.vmem %s6, 2
    %v1009 = vld [vmem:[%s1008] sm:$0x1]
    %v1011 = vperm.slane %v1009, 0
    %v1029 = vunpack.c.l.b16 %v992
    %v1030 = vunpack.c.l.b16 %v993
    %v1031 = vunpack.c.l.b16 %v994
    %v1032 = vunpack.c.l.b16 %v995
    %v1033 = vunpack.c.l.b16 %v996
    %v1034 = vunpack.c.l.b16 %v997
    %v1035 = vunpack.c.l.b16 %v998
    %v1036 = vunpack.c.l.b16 %v999
    %v1037 = vunpack.c.l.b16 %v1000
    %v1038 = vunpack.c.l.b16 %v1001
    %v1039 = vunpack.c.l.b16 %v1002
    %v1040 = vunpack.c.l.b16 %v1003
    %v1041 = vunpack.c.l.b16 %v1004
    %v1042 = vunpack.c.l.b16 %v1005
    %v1043 = vunpack.c.l.b16 %v1006
    %v1044 = vunpack.c.l.b16 %v1007
    %v1045 = vpack.c.b16 %v1030, %v1029
    %v1046 = vpack.c.b16 %v1032, %v1031
    %v1047 = vpack.c.b16 %v1034, %v1033
    %v1048 = vpack.c.b16 %v1036, %v1035
    %v1049 = vpack.c.b16 %v1038, %v1037
    %v1050 = vpack.c.b16 %v1040, %v1039
    %v1051 = vpack.c.b16 %v1042, %v1041
    %v1052 = vpack.c.b16 %v1044, %v1043
    %1061 = vmatpush.bf16.msra.mxu0 %v1052
    %1062 = vmatpush.bf16.msra.mxu0 %v1051
    %1063 = vmatpush.bf16.msra.mxu0 %v1050
    %1064 = vmatpush.bf16.msra.mxu0 %v1049
    %1065 = vmatpush.bf16.msra.mxu0 %v1048
    %1066 = vmatpush.bf16.msra.mxu0 %v1047
    %1067 = vmatpush.bf16.msra.mxu0 %v1046
    %1068 = vmatpush.bf16.msra.mxu0 %v1045
    %1069 = vmatmul.bf16.gmra.mxu0 %v990
    %v1070 = vpop.f32.mrf.mxu0
    %v1071 = vadd.f32 %v1011, %v1070
    %v1072 = vpop.f32.mrf.mxu0
    %v1073 = vadd.f32 %v1011, %v1072
    %1074 = vdwg.mxu0
    %v1075 = vmax.f32 %v1071, 0.0
    %v1076 = vmax.f32 %v1073, 0.0
    %v1077 = vpack.c.bf16 %v1076, %v1075
    %s1078 = scalar_lea.vmem [#allocation13], 128
    %v1079 = vld [vmem:[%s1078] sm:$0xf]
    %v1080 = vld [vmem:[%s1078 + $0x4] sm:$0xf]
    %v1081 = vld [vmem:[%s1078 + $0x8] sm:$0xf]
    %v1082 = vld [vmem:[%s1078 + $0xc] sm:$0xf]
    %v1083 = vld [vmem:[%s1078 + $0x10] sm:$0xf]
    %v1084 = vld [vmem:[%s1078 + $0x14] sm:$0xf]
    %v1085 = vld [vmem:[%s1078 + $0x18] sm:$0xf]
    %v1086 = vld [vmem:[%s1078 + $0x1c] sm:$0xf]
    %v1087 = vld [vmem:[%s1078 + $0x20] sm:$0xf]
    %v1088 = vld [vmem:[%s1078 + $0x24] sm:$0xf]
    %v1089 = vld [vmem:[%s1078 + $0x28] sm:$0xf]
    %v1090 = vld [vmem:[%s1078 + $0x2c] sm:$0xf]
    %v1091 = vld [vmem:[%s1078 + $0x30] sm:$0xf]
    %v1092 = vld [vmem:[%s1078 + $0x34] sm:$0xf]
    %v1093 = vld [vmem:[%s1078 + $0x38] sm:$0xf]
    %v1094 = vld [vmem:[%s1078 + $0x3c] sm:$0xf]
    %s1095 = scalar_lea.vmem %s8, 2
    %v1096 = vld [vmem:[%s1095] sm:$0x1]
    %v1098 = vperm.slane %v1096, 0
    %v1116 = vunpack.c.l.b16 %v1079
    %v1117 = vunpack.c.l.b16 %v1080
    %v1118 = vunpack.c.l.b16 %v1081
    %v1119 = vunpack.c.l.b16 %v1082
    %v1120 = vunpack.c.l.b16 %v1083
    %v1121 = vunpack.c.l.b16 %v1084
    %v1122 = vunpack.c.l.b16 %v1085
    %v1123 = vunpack.c.l.b16 %v1086
    %v1124 = vunpack.c.l.b16 %v1087
    %v1125 = vunpack.c.l.b16 %v1088
    %v1126 = vunpack.c.l.b16 %v1089
    %v1127 = vunpack.c.l.b16 %v1090
    %v1128 = vunpack.c.l.b16 %v1091
    %v1129 = vunpack.c.l.b16 %v1092
    %v1130 = vunpack.c.l.b16 %v1093
    %v1131 = vunpack.c.l.b16 %v1094
    %v1132 = vpack.c.b16 %v1117, %v1116
    %v1133 = vpack.c.b16 %v1119, %v1118
    %v1134 = vpack.c.b16 %v1121, %v1120
    %v1135 = vpack.c.b16 %v1123, %v1122
    %v1136 = vpack.c.b16 %v1125, %v1124
    %v1137 = vpack.c.b16 %v1127, %v1126
    %v1138 = vpack.c.b16 %v1129, %v1128
    %v1139 = vpack.c.b16 %v1131, %v1130
    %1148 = vmatpush.bf16.msra.mxu0 %v1139
    %1149 = vmatpush.bf16.msra.mxu0 %v1138
    %1150 = vmatpush.bf16.msra.mxu0 %v1137
    %1151 = vmatpush.bf16.msra.mxu0 %v1136
    %1152 = vmatpush.bf16.msra.mxu0 %v1135
    %1153 = vmatpush.bf16.msra.mxu0 %v1134
    %1154 = vmatpush.bf16.msra.mxu0 %v1133
    %1155 = vmatpush.bf16.msra.mxu0 %v1132
    %1156 = vmatmul.bf16.gmra.mxu0 %v1077
    %v1157 = vpop.f32.mrf.mxu0
    %v1158 = vadd.f32 %v1098, %v1157
    %v1159 = vpop.f32.mrf.mxu0
    %v1160 = vadd.f32 %v1098, %v1159
    %1161 = vdwg.mxu0
    %v1162 = vadd.f32 %v1158, %v1160
    %v1163 = vrot.slane %v1162, 4
    %v1164 = vadd.f32 %v1162, %v1163
    %v1165 = vrot.slane %v1164, 2
    %v1166 = vadd.f32 %v1164, %v1165
    %v1167 = vrot.slane %v1166, 1
    %v1168 = vadd.f32 %v1166, %v1167
    %v1169 = vmul.f32 %v1168, %v493
    %v1170 = vsub.f32 %v1158, %v1169
    %v1171 = vsub.f32 %v1160, %v1169
    %v1172 = vmul.f32 %v1170, %v1170
    %v1173 = vmul.f32 %v1171, %v1171
    %v1174 = vadd.f32 %v1172, %v1173
    %v1175 = vrot.slane %v1174, 4
    %v1176 = vadd.f32 %v1174, %v1175
    %v1177 = vrot.slane %v1176, 2
    %v1178 = vadd.f32 %v1176, %v1177
    %v1179 = vrot.slane %v1178, 1
    %v1180 = vadd.f32 %v1178, %v1179
    %v1181 = vmul.f32 %v1180, %v493
    %v1182 = vadd.f32 %v1181, 1e-05
    %v1183 = vrsqrt.pop %v1182
    %v1184 = vmul.f32 %v1183, %v1182
    %v1185 = vmul.f32 %v1184, %v1183
    %v1186 = vmul.f32 0.5, %v1185
    %v1187 = vsub.f32 1.5, %v1186
    %v1188 = vmul.f32 %v1183, %v1187
    %vm1189 = vweird.f32 %v1182
    %vm1190 = vweird.f32 %v1183
    %vm1191 = vmor %vm1189, %vm1190
    %v1192 = vsel %vm1191, %v1183, %v1188
    %v1193 = vmul.f32 %v1170, %v1192
    %v1194 = vmul.f32 %v1171, %v1192
    %s1195 = scalar_lea.vmem [#allocation14], 2
    %v1196 = vld [vmem:[%s1195] sm:$0x1]
    %v1198 = vperm.slane %v1196, 0
    %v1200 = vmul.f32 %v1193, %v1198
    %v1201 = vmul.f32 %v1194, %v1198
    %s1202 = scalar_lea.vmem %s10, 2
    %v1203 = vld [vmem:[%s1202] sm:$0x1]
    %v1205 = vperm.slane %v1203, 0
    %v1207 = vadd.f32 %v1200, %v1205
    %v1208 = vadd.f32 %v1201, %v1205
    %v1209 = vmax.f32 %v1207, 0.0
    %v1210 = vmax.f32 %v1208, 0.0
    %v1211 = vadd.f32 %v1209, %v873
    %v1212 = vadd.f32 %v1210, %v874
    %v1213 = vpack.c.bf16 %v1212, %v1211
    %1214 = vmatpush.bf16.msra.mxu0 0
    %1215 = vmatpush.bf16.msra.mxu0 0
    %1216 = vmatpush.bf16.msra.mxu0 0
    %1217 = vmatpush.bf16.msra.mxu0 0
    %1218 = vmatpush.bf16.msra.mxu0 0
    %1219 = vmatpush.bf16.msra.mxu0 0
    %1220 = vmatpush.bf16.msra.mxu0 0
    %1221 = vmatpush.bf16.msra.mxu0 %v1213
    %1222 = vmatmul.bf16.gmra.mxu0 %v538
    %v1223 = vpop.f32.mrf.mxu0
    %v1224 = vadd.f32 0.0, %v1223
    %v1225 = vpop.f32.mrf.mxu0
    %1226 = vdwg.mxu0
    %v1227 = vpack.c.bf16 %v1224, %v1224
    %s1228 = scalar_lea.vmem [#allocation16], 128
    %v1229 = vld [vmem:[%s1228] sm:$0xf]
    %v1230 = vld [vmem:[%s1228 + $0x4] sm:$0xf]
    %v1231 = vld [vmem:[%s1228 + $0x8] sm:$0xf]
    %v1232 = vld [vmem:[%s1228 + $0xc] sm:$0xf]
    %v1233 = vld [vmem:[%s1228 + $0x10] sm:$0xf]
    %v1234 = vld [vmem:[%s1228 + $0x14] sm:$0xf]
    %v1235 = vld [vmem:[%s1228 + $0x18] sm:$0xf]
    %v1236 = vld [vmem:[%s1228 + $0x1c] sm:$0xf]
    %v1237 = vld [vmem:[%s1228 + $0x20] sm:$0xf]
    %v1238 = vld [vmem:[%s1228 + $0x24] sm:$0xf]
    %v1239 = vld [vmem:[%s1228 + $0x28] sm:$0xf]
    %v1240 = vld [vmem:[%s1228 + $0x2c] sm:$0xf]
    %v1241 = vld [vmem:[%s1228 + $0x30] sm:$0xf]
    %v1242 = vld [vmem:[%s1228 + $0x34] sm:$0xf]
    %v1243 = vld [vmem:[%s1228 + $0x38] sm:$0xf]
    %v1244 = vld [vmem:[%s1228 + $0x3c] sm:$0xf]
    %s1245 = scalar_lea.vmem [#allocation17], 2
    %v1246 = vld [vmem:[%s1245] sm:$0x1]
    %v1248 = vperm.slane %v1246, 0
    %v1266 = vunpack.c.l.b16 %v1229
    %v1267 = vunpack.c.l.b16 %v1230
    %v1268 = vunpack.c.l.b16 %v1231
    %v1269 = vunpack.c.l.b16 %v1232
    %v1270 = vunpack.c.l.b16 %v1233
    %v1271 = vunpack.c.l.b16 %v1234
    %v1272 = vunpack.c.l.b16 %v1235
    %v1273 = vunpack.c.l.b16 %v1236
    %v1274 = vunpack.c.l.b16 %v1237
    %v1275 = vunpack.c.l.b16 %v1238
    %v1276 = vunpack.c.l.b16 %v1239
    %v1277 = vunpack.c.l.b16 %v1240
    %v1278 = vunpack.c.l.b16 %v1241
    %v1279 = vunpack.c.l.b16 %v1242
    %v1280 = vunpack.c.l.b16 %v1243
    %v1281 = vunpack.c.l.b16 %v1244
    %v1282 = vpack.c.b16 %v1267, %v1266
    %v1283 = vpack.c.b16 %v1269, %v1268
    %v1284 = vpack.c.b16 %v1271, %v1270
    %v1285 = vpack.c.b16 %v1273, %v1272
    %v1286 = vpack.c.b16 %v1275, %v1274
    %v1287 = vpack.c.b16 %v1277, %v1276
    %v1288 = vpack.c.b16 %v1279, %v1278
    %v1289 = vpack.c.b16 %v1281, %v1280
    %1298 = vmatpush.bf16.msra.mxu0 %v1289
    %1299 = vmatpush.bf16.msra.mxu0 %v1288
    %1300 = vmatpush.bf16.msra.mxu0 %v1287
    %1301 = vmatpush.bf16.msra.mxu0 %v1286
    %1302 = vmatpush.bf16.msra.mxu0 %v1285
    %1303 = vmatpush.bf16.msra.mxu0 %v1284
    %1304 = vmatpush.bf16.msra.mxu0 %v1283
    %1305 = vmatpush.bf16.msra.mxu0 %v1282
    %1306 = vmatmul.bf16.gmra.mxu0 %v1227
    %v1307 = vpop.f32.mrf.mxu0
    %v1308 = vadd.f32 %v1248, %v1307
    %v1309 = vpop.f32.mrf.mxu0
    %1310 = vdwg.mxu0
    %v1311 = vadd.f32 %v973, %v1308
    %1312 = vst [vmem:[#allocation19] sm:$0x3] %v1311
    // Predicated region
    $region94: #{tpu_custom_call.1} parent=1 // pred_check
      _
    $region95: #{tpu_custom_call.1} parent=1 // pred_check_branch
      %1314 = sbr.rel (0) target = $region97
    $region96: #{tpu_custom_call.1} parent=1 // pred_region
      %1316 = vsyncadd [#allocation4], 0
      %s1318 = sshll.u32 [#allocation19], 4
      %s1319 = int_to_ptr.vmem [resolvable:$true] %s1318
      %s1320 = sshll.u32 %s13, 4
      %s1321 = int_to_ptr.hbm [resolvable:$true] %s1320
      %1323 = dma.vmem_to_hbm [thread:$0]  %s1319, 32, %s1321, [#allocation4]
    $region97: #{tpu_custom_call.1} parent=1 // pred_fallthru
      _
    // Predicated region
    $region98: #{tpu_custom_call.1} parent=1 // pred_check
      _
    $region99: #{tpu_custom_call.1} parent=1 // pred_check_branch
      %1325 = sbr.rel (0) target = $region101
    $region100: #{tpu_custom_call.1} parent=1 // pred_region
      %1327 = dma.done [#allocation4], 32
    $region101: #{tpu_custom_call.1} parent=1 // pred_fallthru
      _
    %1328 = vsyncpa [#allocation3], 1
    %1329 = vsyncpa [#allocation6], 1
    %1330 = vsyncpa [#allocation9], 1
    %1331 = vsyncpa [#allocation12], 1
    %1332 = vsyncpa [#allocation15], 1
    %1333 = vsyncpa [#allocation18], 1
    %1334 = vsyncpa [#allocation4], 1

</llo_original>
